<compile_context>
chip_gen: v7x
topology: tpu7x:2x2x1
jax: 0.10.0
libtpu: 0.0.40
codegen_flags: <defaults>
</compile_context>

<pallas_src>
import functools
import math

import jax
import jax.numpy as jnp
from jax import lax
from jax.experimental import pallas as pl
from jax.experimental.pallas import tpu as pltpu

_INV_SQRT_2PI = 1.0 / math.sqrt(2.0 * math.pi)
_LN3 = math.log(3.0)
_NEG_BIG = -1e30  # additive mask; exp() underflows to exactly 0, rows stay finite


def _round_up(x, m):
    return ((x + m - 1) // m) * m


def _anomaly_attention_kernel(nd2_ref, bias_ref, q_ref, k_ref, v_ref, sig_ref,
                              v_out_ref, series_ref, prior_ref, sigma_out_ref,
                              *, scale, mxu_dtype):
    """One grid step = `Bt` batch elements, all heads at once.

    nd2_ref   : (Lp, Sp)        grid-invariant  -0.5 * (i - j)^2
    bias_ref  : (Lp, Sp)        grid-invariant additive mask (0 / -1e30);
                                covers the causal mask AND padded key columns
    q_ref     : (Bt, Lp, H, E)  native PyTorch layout
    k_ref     : (Bt, Sp, H, E)
    v_ref     : (Bt, Sp, H, D)
    sig_ref   : (Bt, Lp, H)
    outputs   : V (Bt, Lp, H, D), series/prior (Bt, H, Lp, Sp), sigma (Bt, H, Lp)
    """
    bt, lp, h, e = q_ref.shape
    _, sp, _, d = v_ref.shape
    g = bt * h

    # Native layout -> head-major (G, L, ...) inside VMEM (relayout only, no
    # HBM cost); scale folded into q before the MXU matmul.
    q = jnp.transpose(q_ref[...] * scale, (0, 2, 1, 3)).reshape(g, lp, e)
    k = jnp.transpose(k_ref[...], (0, 2, 1, 3)).reshape(g, sp, e)
    v = jnp.transpose(v_ref[...], (0, 2, 1, 3)).reshape(g, sp, d)

    # scores = (scale*q) @ k^T, batched over Bt*H on the MXU.  Operands rounded
    # to `mxu_dtype` (bf16 -> single MXU pass), accumulation stays f32; the
    # test reference applies the same rounding.
    scores = lax.dot_general(
        q.astype(mxu_dtype), k.astype(mxu_dtype),
        (((2,), (2,)), ((0,), (0,))),                      # NT batched matmul
        preferred_element_type=jnp.float32)                # (G, Lp, Sp)
    # TODO(synk): NN-form alternative (permute k once to (G, E, S)) would save
    # one Mosaic relayout in front of the MXU; kept NT for lowering safety.
    attn = scores + bias_ref[...][None, :, :]

    # Numerically stable softmax; exact per-row reciprocal (the approx EUP
    # reciprocal cost ~1e-3 relative error and broke row-stochasticity).
    m = jnp.max(attn, axis=-1, keepdims=True)              # (G, Lp, 1)
    ex = jnp.exp(attn - m)
    inv_den = pl.reciprocal(jnp.sum(ex, axis=-1, keepdims=True), approx=False)
    series = ex * inv_den                                   # (G, Lp, Sp)

    # V = series @ v, batched over Bt*H on the MXU.
    out = lax.dot_general(
        series.astype(mxu_dtype), v.astype(mxu_dtype),
        (((2,), (1,)), ((0,), (0,))),                       # NN batched matmul
        preferred_element_type=jnp.float32)                 # (G, Lp, D)

    # Sigma post-processing (only H*L elements); 3**x computed as exp(x*ln3).
    sg = jax.nn.sigmoid(sig_ref[...] * 5.0) + 1e-5          # (Bt, Lp, H)
    sg = jnp.exp(sg * _LN3) - 1.0
    sg = jnp.transpose(sg, (0, 2, 1))                       # (Bt, H, Lp)

    # Gaussian prior: divisions hoisted to per-row reciprocals + broadcasts.
    inv_s = pl.reciprocal(sg, approx=False)[..., None]      # (Bt, H, Lp, 1)
    prior = (_INV_SQRT_2PI * inv_s) * jnp.exp(
        nd2_ref[...][None, None, :, :] * (inv_s * inv_s))   # (Bt, H, Lp, Sp)

    # TODO(synk): lane-collapsed (Bt, Lp, H*D) V slab (review item) skipped to
    # keep Mosaic reshape/concat lowering risk at zero; V is the minor output.
    v_out_ref[...] = jnp.transpose(out.reshape(bt, h, lp, d),
                                   (0, 2, 1, 3)).astype(v_out_ref.dtype)
    series_ref[...] = series.reshape(bt, h, lp, sp).astype(series_ref.dtype)
    prior_ref[...] = prior.astype(prior_ref.dtype)
    sigma_out_ref[...] = sg.astype(sigma_out_ref.dtype)


def anomaly_attention(queries, keys, values, sigma, *, scale=None,
                      mask_flag=True, mxu_dtype=jnp.bfloat16, block_b=None):
    """queries: (B, L, H, E); keys: (B, S, H, E); values: (B, S, H, D);
    sigma: (B, L, H).  Returns (V, series, prior, sigma_processed) with
    V: (B, L, H, D) and series/prior/sigma: (B, H, L, S), matching
    AnomalyAttention.forward(output_attention=True, attn_mask=None, p=0.0)."""
    B, L, H, E = queries.shape
    _, S, _, D = values.shape
    scale = scale if scale is not None else 1.0 / math.sqrt(E)

    # Lane/sublane-friendly padding: pad the key axis to 128 only when the
    # relative inflation is modest (win_size ~100 -> 128 gives lane-dense
    # series/prior stores); tiny windows keep their natural size.
    Lp = _round_up(L, 8)
    Sp = _round_up(S, 128) if S >= 64 else _round_up(S, 8)

    q_p, sig_p = queries, sigma
    if Lp != L:
        q_p = jnp.pad(queries, ((0, 0), (0, Lp - L), (0, 0), (0, 0)))
        sig_p = jnp.pad(sigma, ((0, 0), (0, Lp - L), (0, 0)))
    k_p, v_p = keys, values
    if Sp != S:
        k_p = jnp.pad(keys, ((0, 0), (0, Sp - S), (0, 0), (0, 0)))
        v_p = jnp.pad(values, ((0, 0), (0, Sp - S), (0, 0), (0, 0)))

    # Grid-invariant (Lp, Sp) constants: their block index never changes, so
    # they stay VMEM-resident across all grid steps.
    i = lax.broadcasted_iota(jnp.int32, (Lp, Sp), 0)
    j = lax.broadcasted_iota(jnp.int32, (Lp, Sp), 1)
    dist = (i - j).astype(jnp.float32)
    nd2 = -0.5 * dist * dist
    masked = j >= S                      # padded key columns always masked
    if mask_flag:
        masked = masked | (j > i)        # TriangularCausalMask (diagonal=1)
    bias = jnp.where(masked, jnp.float32(_NEG_BIG), jnp.float32(0.0))

    # ---- pick Bt = batch elements fused per grid step (VMEM-budgeted) ------
    blk_elems = (Lp * H * E + Sp * H * E + Sp * H * D + Lp * H        # inputs
                 + Lp * H * D + 2 * H * Lp * Sp + H * Lp)             # outputs
    per_b_bytes = 4 * (2 * blk_elems + 4 * H * Lp * Sp)   # dbl-buffer + temps
    budget = 24 * 2**20                  # conservative: fits v7x's 64 MiB VMEM
    if block_b is None:
        block_b = 1
        for bt in range(1, B + 1):
            if B % bt:
                continue
            if B >= 2 and (B // bt) < 2:
                continue                 # keep >=2 parallel steps (v7x: 2 TCs)
            if bt * per_b_bytes <= budget:
                block_b = bt
    Bt = block_b
    grid = (B // Bt,)
    vmem_limit = int(min(64 * 2**20,
                         max(32 * 2**20,
                             2 * (Bt * per_b_bytes + 8 * Lp * Sp))))

    kernel = functools.partial(_anomaly_attention_kernel,
                               scale=scale, mxu_dtype=mxu_dtype)

    out_shapes = (
        jax.ShapeDtypeStruct((B, Lp, H, D), jnp.float32),    # V (native layout)
        jax.ShapeDtypeStruct((B, H, Lp, Sp), jnp.float32),   # series
        jax.ShapeDtypeStruct((B, H, Lp, Sp), jnp.float32),   # prior
        jax.ShapeDtypeStruct((B, H, Lp), jnp.float32),       # sigma (compact)
    )

    const_spec = pl.BlockSpec((Lp, Sp), lambda g: (0, 0))
    map4 = lambda g: (g, 0, 0, 0)
    map3 = lambda g: (g, 0, 0)

    cost = pl.CostEstimate(
        flops=int(2 * B * H * Lp * Sp * (E + D)),
        transcendentals=int(2 * B * H * Lp * Sp + 3 * B * H * Lp),
        bytes_accessed=int(4 * (B * Lp * H * E + B * Sp * H * (E + D)
                                + B * Lp * H + B * Lp * H * D
                                + 2 * B * H * Lp * Sp + B * H * Lp)))

    # TODO(synk): for win_size >~512 on v7x (64 MiB VMEM) add an S-tiled
    # online-softmax or head-tiled path; a single (H, L, S) f32 block no
    # longer fits there.
    v_out, series, prior, sigma_hl = pl.pallas_call(
        kernel,
        out_shape=out_shapes,
        grid_spec=pltpu.PrefetchScalarGridSpec(
            num_scalar_prefetch=0,
            grid=grid,                                        # B//Bt fat steps
            in_specs=[
                const_spec,                                   # -0.5 * dist^2
                const_spec,                                   # additive mask
                pl.BlockSpec((Bt, Lp, H, E), map4),           # queries (native)
                pl.BlockSpec((Bt, Sp, H, E), map4),           # keys
                pl.BlockSpec((Bt, Sp, H, D), map4),           # values
                pl.BlockSpec((Bt, Lp, H), map3),              # sigma
            ],
            out_specs=[
                pl.BlockSpec((Bt, Lp, H, D), map4),           # V
                pl.BlockSpec((Bt, H, Lp, Sp), map4),          # series
                pl.BlockSpec((Bt, H, Lp, Sp), map4),          # prior
                pl.BlockSpec((Bt, H, Lp), map3),              # sigma compact
            ],
        ),
        compiler_params=pltpu.CompilerParams(
            dimension_semantics=("parallel",),
            vmem_limit_bytes=vmem_limit),
        cost_estimate=cost,
    )(nd2, bias, q_p, k_p, v_p, sig_p)

    if Lp != L or Sp != S:
        v_out = v_out[:, :L]
        series = series[:, :, :L, :S]
        prior = prior[:, :, :L, :S]
        sigma_hl = sigma_hl[:, :, :L]

    # Module parity: the PyTorch forward returns sigma repeated to (B,H,L,S).
    # TODO(synk): return the compact (B,H,L) sigma / fuse this broadcast into
    # the association-discrepancy consumer to avoid materializing it in HBM.
    sigma_out = jnp.broadcast_to(sigma_hl[..., None], (B, H, L, S))
    return v_out, series, prior, sigma_out


def _reference(queries, keys, values, sigma, *, scale=None, mask_flag=True,
               mxu_dtype=jnp.bfloat16):
    """Pure-jnp reference mirroring the PyTorch forward (dropout p=0), with the
    same MXU-input rounding as the kernel so the comparison is apples-to-apples."""
    B, L, H, E = queries.shape
    _, S, _, D = values.shape
    scale = scale if scale is not None else 1.0 / math.sqrt(E)
    q = (queries * scale).astype(mxu_dtype)
    k = keys.astype(mxu_dtype)
    scores = jnp.einsum('blhe,bshe->bhls', q, k,
                        preferred_element_type=jnp.float32)
    if mask_flag:
        causal = jnp.triu(jnp.ones((L, S), dtype=bool), k=1)[None, None]
        scores = jnp.where(causal, -jnp.inf, scores)
    series = jax.nn.softmax(scores, axis=-1)
    V = jnp.einsum('bhls,bshd->blhd', series.astype(mxu_dtype),
                   values.astype(mxu_dtype), preferred_element_type=jnp.float32)
    sig = jnp.transpose(sigma, (0, 2, 1))                     # (B, H, L)
    sig = jax.nn.sigmoid(sig * 5.0) + 1e-5
    sig = jnp.power(3.0, sig) - 1.0
    i = jnp.arange(L)[:, None]
    j = jnp.arange(S)[None, :]
    dist = jnp.abs(i - j).astype(jnp.float32)[None, None]
    prior = 1.0 / (math.sqrt(2.0 * math.pi) * sig[..., None]) * jnp.exp(
        -dist ** 2 / 2.0 / (sig[..., None] ** 2))
    sig_full = jnp.broadcast_to(sig[..., None], (B, H, L, S))
    return V, series, prior, sig_full


if __name__ == "__main__":
    # Small shapes implied by the forward: win_size L = S = 8, H = 4 heads,
    # head dims E = D = 32, batch B = 2.
    B, L, H, E = 2, 8, 4, 32
    S, D = L, E
    key = jax.random.PRNGKey(0)
    kq, kk, kv, ks = jax.random.split(key, 4)
    queries = jax.random.normal(kq, (B, L, H, E), dtype=jnp.float32)
    keys = jax.random.normal(kk, (B, S, H, E), dtype=jnp.float32)
    values = jax.random.normal(kv, (B, S, H, D), dtype=jnp.float32)
    # Modest sigma scale keeps 3**(sigmoid(5x)+1e-5)-1 away from the f32
    # cancellation regime (x -> -inf) so the kernel/reference comparison of
    # prior/sigma stays well conditioned.
    sigma = 0.5 * jax.random.normal(ks, (B, L, H), dtype=jnp.float32)

    V, series, prior, sig_out = anomaly_attention(queries, keys, values, sigma)
    jax.block_until_ready((V, series, prior, sig_out))

    V_ref, series_ref, prior_ref, sig_ref = _reference(queries, keys, values, sigma)

    assert V.shape == (B, L, H, D) and series.shape == (B, H, L, S)
    assert prior.shape == (B, H, L, S) and sig_out.shape == (B, H, L, S)
    # Kernel and reference share the same bf16 MXU-input rounding and f32
    # accumulation, so V/series agree tightly; sigma/prior carry intrinsic f32
    # cancellation in (3**x - 1) for small x that amplifies last-ulp exp/pow
    # differences, hence the looser relative tolerance there.
    assert jnp.allclose(V, V_ref, rtol=5e-3, atol=5e-3), \
        float(jnp.max(jnp.abs(V - V_ref)))
    assert jnp.allclose(series, series_ref, rtol=5e-3, atol=5e-3), \
        float(jnp.max(jnp.abs(series - series_ref)))
    assert jnp.allclose(prior, prior_ref, rtol=2e-2, atol=1e-4), \
        float(jnp.max(jnp.abs(prior - prior_ref)))
    assert jnp.allclose(sig_out, sig_ref, rtol=2e-2, atol=1e-6), \
        float(jnp.max(jnp.abs(sig_out - sig_ref)))

    print("KERNEL_OK")
</pallas_src>

<mosaic_0001>
module attributes {stable_mosaic.version = 11 : i64} {
  func.func @_anomaly_attention_kernel(%arg0: i32, %arg1: memref<8x8xf32, #tpu.memory_space<vmem>>, %arg2: memref<8x8xf32, #tpu.memory_space<vmem>>, %arg3: memref<1x8x4x32xf32, #tpu.memory_space<vmem>>, %arg4: memref<1x8x4x32xf32, #tpu.memory_space<vmem>>, %arg5: memref<1x8x4x32xf32, #tpu.memory_space<vmem>>, %arg6: memref<1x8x4xf32, #tpu.memory_space<vmem>>, %arg7: memref<1x8x4x32xf32, #tpu.memory_space<vmem>>, %arg8: memref<1x4x8x8xf32, #tpu.memory_space<vmem>>, %arg9: memref<1x4x8x8xf32, #tpu.memory_space<vmem>>, %arg10: memref<1x4x8xf32, #tpu.memory_space<vmem>>) attributes {dimension_semantics = [#tpu.dimension_semantics<parallel>], iteration_bounds = array<i64: 2>, scalar_prefetch = 0 : i64, scratch_operands = 0 : i64, tpu.core_type = #tpu.core_type<tc>, window_params = [{pipeline_mode = #tpu.pipeline_mode<synchronous>, transform_indices = @transform_0, window_bounds = array<i64: 8, 8>}, {pipeline_mode = #tpu.pipeline_mode<synchronous>, transform_indices = @transform_1, window_bounds = array<i64: 8, 8>}, {transform_indices = @transform_2, window_bounds = array<i64: 1, 8, 4, 32>}, {transform_indices = @transform_3, window_bounds = array<i64: 1, 8, 4, 32>}, {transform_indices = @transform_4, window_bounds = array<i64: 1, 8, 4, 32>}, {transform_indices = @transform_5, window_bounds = array<i64: 1, 8, 4>}, {transform_indices = @transform_6, window_bounds = array<i64: 1, 8, 4, 32>}, {transform_indices = @transform_7, window_bounds = array<i64: 1, 4, 8, 8>}, {transform_indices = @transform_8, window_bounds = array<i64: 1, 4, 8, 8>}, {transform_indices = @transform_9, window_bounds = array<i64: 1, 4, 8>}]} {
    %c0 = arith.constant 0 : index
    %c0_0 = arith.constant 0 : index
    %c0_1 = arith.constant 0 : index
    %c0_2 = arith.constant 0 : index
    %0 = vector.load %arg3[%c0, %c0_0, %c0_1, %c0_2] : memref<1x8x4x32xf32, #tpu.memory_space<vmem>>, vector<1x8x4x32xf32>
    %cst = arith.constant 0.176776692 : f32
    %1 = vector.broadcast %cst : f32 to vector<1x8x4x32xf32>
    %2 = arith.mulf %0, %1 : vector<1x8x4x32xf32>
    %3 = tpu.transpose %2, [0, 2, 1, 3] : vector<1x8x4x32xf32> -> vector<1x4x8x32xf32>
    %4 = vector.shape_cast %3 : vector<1x4x8x32xf32> to vector<4x8x32xf32>
    %c0_3 = arith.constant 0 : index
    %c0_4 = arith.constant 0 : index
    %c0_5 = arith.constant 0 : index
    %c0_6 = arith.constant 0 : index
    %5 = vector.load %arg4[%c0_3, %c0_4, %c0_5, %c0_6] : memref<1x8x4x32xf32, #tpu.memory_space<vmem>>, vector<1x8x4x32xf32>
    %6 = tpu.transpose %5, [0, 2, 1, 3] : vector<1x8x4x32xf32> -> vector<1x4x8x32xf32>
    %7 = vector.shape_cast %6 : vector<1x4x8x32xf32> to vector<4x8x32xf32>
    %c0_7 = arith.constant 0 : index
    %c0_8 = arith.constant 0 : index
    %c0_9 = arith.constant 0 : index
    %c0_10 = arith.constant 0 : index
    %8 = vector.load %arg5[%c0_7, %c0_8, %c0_9, %c0_10] : memref<1x8x4x32xf32, #tpu.memory_space<vmem>>, vector<1x8x4x32xf32>
    %9 = tpu.transpose %8, [0, 2, 1, 3] : vector<1x8x4x32xf32> -> vector<1x4x8x32xf32>
    %10 = vector.shape_cast %9 : vector<1x4x8x32xf32> to vector<4x8x32xf32>
    %11 = arith.truncf %4 : vector<4x8x32xf32> to vector<4x8x32xbf16>
    %12 = arith.truncf %7 : vector<4x8x32xf32> to vector<4x8x32xbf16>
    %cst_11 = arith.constant dense<0.000000e+00> : vector<4x8x8xf32>
    %13 = tpu.matmul %11, %12, %cst_11 {dimension_numbers = #tpu.dot_dimension_numbers<[2], [2], [1], [1], [0, 0, 0, 1, 1, 1], [0], [0]>} : vector<4x8x32xbf16>, vector<4x8x32xbf16>, vector<4x8x8xf32> -> vector<4x8x8xf32>
    %c0_12 = arith.constant 0 : index
    %c0_13 = arith.constant 0 : index
    %14 = vector.load %arg2[%c0_12, %c0_13] : memref<8x8xf32, #tpu.memory_space<vmem>>, vector<8x8xf32>
    %15 = vector.shape_cast %14 : vector<8x8xf32> to vector<1x8x8xf32>
    %16 = vector.broadcast %15 : vector<1x8x8xf32> to vector<4x8x8xf32>
    %17 = arith.addf %13, %16 : vector<4x8x8xf32>
    %cst_14 = arith.constant dense<0xFF800000> : vector<4x8xf32>
    %18 = vector.multi_reduction <maximumf>, %17, %cst_14 [2] : vector<4x8x8xf32> to vector<4x8xf32>
    %19 = vector.shape_cast %18 : vector<4x8xf32> to vector<4x8x1xf32>
    %20 = vector.broadcast %19 : vector<4x8x1xf32> to vector<4x8x8xf32>
    %21 = arith.subf %17, %20 : vector<4x8x8xf32>
    %22 = math.exp %21 : vector<4x8x8xf32>
    %cst_15 = arith.constant dense<0.000000e+00> : vector<4x8xf32>
    %23 = vector.multi_reduction <add>, %22, %cst_15 [2] : vector<4x8x8xf32> to vector<4x8xf32>
    %24 = vector.shape_cast %23 : vector<4x8xf32> to vector<4x8x1xf32>
    %25 = tpu.reciprocal %24 : vector<4x8x1xf32> -> vector<4x8x1xf32>
    %26 = vector.broadcast %25 : vector<4x8x1xf32> to vector<4x8x8xf32>
    %27 = arith.mulf %22, %26 : vector<4x8x8xf32>
    %28 = arith.truncf %27 : vector<4x8x8xf32> to vector<4x8x8xbf16>
    %29 = arith.truncf %10 : vector<4x8x32xf32> to vector<4x8x32xbf16>
    %cst_16 = arith.constant dense<0.000000e+00> : vector<4x8x32xf32>
    %30 = tpu.matmul %28, %29, %cst_16 {dimension_numbers = #tpu.dot_dimension_numbers<[2], [1], [1], [2], [0, 0, 0, 1, 1, 2], [0], [0]>} : vector<4x8x8xbf16>, vector<4x8x32xbf16>, vector<4x8x32xf32> -> vector<4x8x32xf32>
    %c0_17 = arith.constant 0 : index
    %c0_18 = arith.constant 0 : index
    %c0_19 = arith.constant 0 : index
    %31 = vector.load %arg6[%c0_17, %c0_18, %c0_19] : memref<1x8x4xf32, #tpu.memory_space<vmem>>, vector<1x8x4xf32>
    %cst_20 = arith.constant 5.000000e+00 : f32
    %32 = vector.broadcast %cst_20 : f32 to vector<1x8x4xf32>
    %33 = arith.mulf %31, %32 : vector<1x8x4xf32>
    %34 = arith.negf %33 : vector<1x8x4xf32>
    %35 = math.exp %34 : vector<1x8x4xf32>
    %cst_21 = arith.constant 1.000000e+00 : f32
    %36 = vector.broadcast %cst_21 : f32 to vector<1x8x4xf32>
    %37 = arith.addf %36, %35 : vector<1x8x4xf32>
    %38 = arith.divf %36, %37 : vector<1x8x4xf32>
    %cst_22 = arith.constant 9.99999974E-6 : f32
    %39 = vector.broadcast %cst_22 : f32 to vector<1x8x4xf32>
    %40 = arith.addf %38, %39 : vector<1x8x4xf32>
    %cst_23 = arith.constant 1.09861231 : f32
    %41 = vector.broadcast %cst_23 : f32 to vector<1x8x4xf32>
    %42 = arith.mulf %40, %41 : vector<1x8x4xf32>
    %43 = math.exp %42 : vector<1x8x4xf32>
    %cst_24 = arith.constant 1.000000e+00 : f32
    %44 = vector.broadcast %cst_24 : f32 to vector<1x8x4xf32>
    %45 = arith.subf %43, %44 : vector<1x8x4xf32>
    %46 = tpu.transpose %45, [0, 2, 1] : vector<1x8x4xf32> -> vector<1x4x8xf32>
    %47 = tpu.reciprocal %46 : vector<1x4x8xf32> -> vector<1x4x8xf32>
    %48 = vector.shape_cast %47 : vector<1x4x8xf32> to vector<1x4x8x1xf32>
    %cst_25 = arith.constant 0.398942292 : f32
    %49 = vector.broadcast %cst_25 : f32 to vector<1x4x8x1xf32>
    %50 = arith.mulf %49, %48 : vector<1x4x8x1xf32>
    %c0_26 = arith.constant 0 : index
    %c0_27 = arith.constant 0 : index
    %51 = vector.load %arg1[%c0_26, %c0_27] : memref<8x8xf32, #tpu.memory_space<vmem>>, vector<8x8xf32>
    %52 = vector.shape_cast %51 : vector<8x8xf32> to vector<1x1x8x8xf32>
    %53 = arith.mulf %48, %48 : vector<1x4x8x1xf32>
    %54 = vector.broadcast %52 : vector<1x1x8x8xf32> to vector<1x4x8x8xf32>
    %55 = vector.broadcast %53 : vector<1x4x8x1xf32> to vector<1x4x8x8xf32>
    %56 = arith.mulf %54, %55 : vector<1x4x8x8xf32>
    %57 = math.exp %56 : vector<1x4x8x8xf32>
    %58 = vector.broadcast %50 : vector<1x4x8x1xf32> to vector<1x4x8x8xf32>
    %59 = arith.mulf %58, %57 : vector<1x4x8x8xf32>
    %60 = vector.shape_cast %30 : vector<4x8x32xf32> to vector<1x4x8x32xf32>
    %61 = tpu.transpose %60, [0, 2, 1, 3] : vector<1x4x8x32xf32> -> vector<1x8x4x32xf32>
    %c0_28 = arith.constant 0 : index
    %c0_29 = arith.constant 0 : index
    %c0_30 = arith.constant 0 : index
    %c0_31 = arith.constant 0 : index
    %62 = vector.load %arg7[%c0_28, %c0_29, %c0_30, %c0_31] : memref<1x8x4x32xf32, #tpu.memory_space<vmem>>, vector<1x8x4x32xf32>
    tpu.vector_store %arg7[%c0_28, %c0_29, %c0_30, %c0_31], %61 {strides = array<i32>} : memref<1x8x4x32xf32, #tpu.memory_space<vmem>>, vector<1x8x4x32xf32>,
    %63 = vector.shape_cast %27 : vector<4x8x8xf32> to vector<1x4x8x8xf32>
    %c0_32 = arith.constant 0 : index
    %c0_33 = arith.constant 0 : index
    %c0_34 = arith.constant 0 : index
    %c0_35 = arith.constant 0 : index
    %64 = vector.load %arg8[%c0_32, %c0_33, %c0_34, %c0_35] : memref<1x4x8x8xf32, #tpu.memory_space<vmem>>, vector<1x4x8x8xf32>
    tpu.vector_store %arg8[%c0_32, %c0_33, %c0_34, %c0_35], %63 {strides = array<i32>} : memref<1x4x8x8xf32, #tpu.memory_space<vmem>>, vector<1x4x8x8xf32>,
    %c0_36 = arith.constant 0 : index
    %c0_37 = arith.constant 0 : index
    %c0_38 = arith.constant 0 : index
    %c0_39 = arith.constant 0 : index
    %65 = vector.load %arg9[%c0_36, %c0_37, %c0_38, %c0_39] : memref<1x4x8x8xf32, #tpu.memory_space<vmem>>, vector<1x4x8x8xf32>
    tpu.vector_store %arg9[%c0_36, %c0_37, %c0_38, %c0_39], %59 {strides = array<i32>} : memref<1x4x8x8xf32, #tpu.memory_space<vmem>>, vector<1x4x8x8xf32>,
    %c0_40 = arith.constant 0 : index
    %c0_41 = arith.constant 0 : index
    %c0_42 = arith.constant 0 : index
    %66 = vector.load %arg10[%c0_40, %c0_41, %c0_42] : memref<1x4x8xf32, #tpu.memory_space<vmem>>, vector<1x4x8xf32>
    tpu.vector_store %arg10[%c0_40, %c0_41, %c0_42], %46 {strides = array<i32>} : memref<1x4x8xf32, #tpu.memory_space<vmem>>, vector<1x4x8xf32>,
    return
  }
  func.func @transform_0(%arg0: i32) -> (i32, i32) {
    %c0_i32 = arith.constant 0 : i32
    %c0_i32_0 = arith.constant 0 : i32
    %c0_i32_1 = arith.constant 0 : i32
    return %c0_i32, %c0_i32_0 : i32, i32
  }
  func.func @transform_1(%arg0: i32) -> (i32, i32) {
    %c0_i32 = arith.constant 0 : i32
    %c0_i32_0 = arith.constant 0 : i32
    %c0_i32_1 = arith.constant 0 : i32
    return %c0_i32, %c0_i32_0 : i32, i32
  }
  func.func @transform_2(%arg0: i32) -> (i32, i32, i32, i32) {
    %c0_i32 = arith.constant 0 : i32
    %c0_i32_0 = arith.constant 0 : i32
    %c0_i32_1 = arith.constant 0 : i32
    %c0_i32_2 = arith.constant 0 : i32
    return %arg0, %c0_i32, %c0_i32_0, %c0_i32_1 : i32, i32, i32, i32
  }
  func.func @transform_3(%arg0: i32) -> (i32, i32, i32, i32) {
    %c0_i32 = arith.constant 0 : i32
    %c0_i32_0 = arith.constant 0 : i32
    %c0_i32_1 = arith.constant 0 : i32
    %c0_i32_2 = arith.constant 0 : i32
    return %arg0, %c0_i32, %c0_i32_0, %c0_i32_1 : i32, i32, i32, i32
  }
  func.func @transform_4(%arg0: i32) -> (i32, i32, i32, i32) {
    %c0_i32 = arith.constant 0 : i32
    %c0_i32_0 = arith.constant 0 : i32
    %c0_i32_1 = arith.constant 0 : i32
    %c0_i32_2 = arith.constant 0 : i32
    return %arg0, %c0_i32, %c0_i32_0, %c0_i32_1 : i32, i32, i32, i32
  }
  func.func @transform_5(%arg0: i32) -> (i32, i32, i32) {
    %c0_i32 = arith.constant 0 : i32
    %c0_i32_0 = arith.constant 0 : i32
    %c0_i32_1 = arith.constant 0 : i32
    return %arg0, %c0_i32, %c0_i32_0 : i32, i32, i32
  }
  func.func @transform_6(%arg0: i32) -> (i32, i32, i32, i32) {
    %c0_i32 = arith.constant 0 : i32
    %c0_i32_0 = arith.constant 0 : i32
    %c0_i32_1 = arith.constant 0 : i32
    %c0_i32_2 = arith.constant 0 : i32
    return %arg0, %c0_i32, %c0_i32_0, %c0_i32_1 : i32, i32, i32, i32
  }
  func.func @transform_7(%arg0: i32) -> (i32, i32, i32, i32) {
    %c0_i32 = arith.constant 0 : i32
    %c0_i32_0 = arith.constant 0 : i32
    %c0_i32_1 = arith.constant 0 : i32
    %c0_i32_2 = arith.constant 0 : i32
    return %arg0, %c0_i32, %c0_i32_0, %c0_i32_1 : i32, i32, i32, i32
  }
  func.func @transform_8(%arg0: i32) -> (i32, i32, i32, i32) {
    %c0_i32 = arith.constant 0 : i32
    %c0_i32_0 = arith.constant 0 : i32
    %c0_i32_1 = arith.constant 0 : i32
    %c0_i32_2 = arith.constant 0 : i32
    return %arg0, %c0_i32, %c0_i32_0, %c0_i32_1 : i32, i32, i32, i32
  }
  func.func @transform_9(%arg0: i32) -> (i32, i32, i32) {
    %c0_i32 = arith.constant 0 : i32
    %c0_i32_0 = arith.constant 0 : i32
    %c0_i32_1 = arith.constant 0 : i32
    return %arg0, %c0_i32, %c0_i32_0 : i32, i32, i32
  }
}

</mosaic_0001>

<llo_original>
// kernel: tpu_custom_call.1
$region0: #{tpu_custom_call.1}
  #allocation0 [shape = 'u32[]', space=smem, size = 0x4, offset = 0x4, fixed_abs, tag = 'smem constant byte address 0x4 - core index']
  #allocation1 [shape = 'u32[144,128]{1,0:T(1,128)}', space=vmem, size = 0x12000, scoped, tag = 'internal scratch']
  %s0 = inlined_call_operand.vmem [shape: f32[8,8], index: 0, kind: input, shape index: {}]
  %s1 = inlined_call_operand.vmem [shape: f32[8,8], index: 1, kind: input, shape index: {}]
  %s2 = inlined_call_operand.hbm [shape: f32[2,8,4,32], index: 2, kind: input, shape index: {}]
  %s3 = inlined_call_operand.hbm [shape: f32[2,8,4,32], index: 3, kind: input, shape index: {}]
  %s4 = inlined_call_operand.hbm [shape: f32[2,8,4,32], index: 4, kind: input, shape index: {}]
  %s5 = inlined_call_operand.vmem [shape: f32[2,8,4], index: 5, kind: input, shape index: {}]
  %s6 = inlined_call_operand.hbm [shape: f32[2,8,4,32], index: 6, kind: output, shape index: {0}]
  %s7 = inlined_call_operand.hbm [shape: f32[2,4,8,8], index: 7, kind: output, shape index: {1}]
  %s8 = inlined_call_operand.hbm [shape: f32[2,4,8,8], index: 8, kind: output, shape index: {2}]
  %s9 = inlined_call_operand.hbm [shape: f32[2,4,8], index: 9, kind: output, shape index: {3}]
  %10 = xla_tuple %s6, %s7, %s8, %s9
  %s11 = sld [smem:[#allocation0]]
  $region93: #{tpu_custom_call.1} parent=0
    _
  %s13 = ssub.s32 1, %s11
  %s14 = scalar_select 0, %s13, %s11
  $region1: #{tpu_custom_call.1} parent=0
    #allocation2 [shape = 'u8[32768]{0}', space=vmem, size = 0x8000, scoped, tag = 'input window, operand 2']
    #allocation3 [shape = 's32[2]{0}', space=sflag, size = 0x8, scoped, tag = 'scoped memory for tpu_custom_call.1']
    #allocation4 [shape = 's32[2]{0}', space=sflag, size = 0x8, scoped, tag = 'scoped memory for tpu_custom_call.1']
    #allocation5 [shape = 'u8[32768]{0}', space=vmem, size = 0x8000, scoped, tag = 'input window, operand 3']
    #allocation6 [shape = 's32[2]{0}', space=sflag, size = 0x8, scoped, tag = 'scoped memory for tpu_custom_call.1']
    #allocation7 [shape = 'u8[32768]{0}', space=vmem, size = 0x8000, scoped, tag = 'input window, operand 4']
    #allocation8 [shape = 'u8[32768]{0}', space=vmem, size = 0x8000, scoped, tag = 'output window, operand 0']
    #allocation9 [shape = 'u8[32768]{0}', space=vmem, size = 0x8000, scoped, tag = 'output window, operand 1']
    #allocation10 [shape = 's32[2]{0}', space=sflag, size = 0x8, scoped, tag = 'scoped memory for tpu_custom_call.1']
    #allocation11 [shape = 'u8[32768]{0}', space=vmem, size = 0x8000, scoped, tag = 'output window, operand 2']
    #allocation12 [shape = 'u8[4096]{0}', space=vmem, size = 0x1000, scoped, tag = 'output window, operand 3']
    #allocation13 [shape = 's32[2]{0}', space=sflag, size = 0x8, scoped, tag = 'scoped memory for tpu_custom_call.1']
    %15 = vsyncpa [#allocation3], 0
    %s16 = scalar_lea.sflag [#allocation3], 1
    %17 = vsyncpa %s16, 0
    %18 = vsyncpa [#allocation6], 0
    %s19 = scalar_lea.sflag [#allocation6], 1
    %20 = vsyncpa %s19, 0
    %21 = vsyncpa [#allocation4], 0
    %s22 = scalar_lea.sflag [#allocation4], 1
    %23 = vsyncpa %s22, 0
    %24 = vsyncpa [#allocation10], 0
    %s25 = scalar_lea.sflag [#allocation10], 1
    %26 = vsyncpa %s25, 0
    %27 = vsyncpa [#allocation13], 0
    %s28 = scalar_lea.sflag [#allocation13], 1
    %29 = vsyncpa %s28, 0
    loop: start=0, step=1, limit=4
    $region2: #{tpu_custom_call.1} parent=1 // loop_pre_header
      _
    $region3: #{tpu_custom_call.1} parent=1 // loop_header
      %s31 = sphi 0, %s35
      %p32 = scmp.ge.s32.totalorder %s31, 4
      %s39 = sphi 0, %s39
      %s41 = sphi 0, %s39
      %s42 = sphi 0, %s41
      %s56 = sphi 0, %s42
      %s60 = sphi 0, %s60
      %s62 = sphi 0, %s60
      %s63 = sphi 0, %s62
      %s77 = sphi 0, %s63
      %s83 = sphi 0, %s85
      %s86 = sphi 0, %s83
      %s87 = sphi 0, %s86
      %s103 = sphi 0, %s87
      %s109 = sphi 0, %s111
      %s112 = sphi 0, %s109
      %s113 = sphi 0, %s112
      %s129 = sphi 0, %s113
      %s135 = sphi 0, %s137
      %s138 = sphi 0, %s135
      %s139 = sphi 0, %s138
      %s155 = sphi 0, %s139
      %s161 = sphi 0, %s163
      %s164 = sphi 0, %s161
      %s165 = sphi 0, %s164
      %s181 = sphi 0, %s165
      %s187 = sphi 0, %s189
      %s190 = sphi 0, %s187
      %s191 = sphi 0, %s190
      %s207 = sphi 0, %s191
      %s213 = sphi 0, %s215
      %s216 = sphi 0, %s213
      %s217 = sphi 0, %s216
      %s233 = sphi 0, %s217
      %s239 = sphi 0, %s241
      %s242 = sphi 0, %s239
      %s243 = sphi 0, %s242
      %s259 = sphi 0, %s243
      %s265 = sphi 0, %s267
      %s268 = sphi 0, %s265
      %s269 = sphi 0, %s268
      %s285 = sphi 0, %s269
    $region4: #{tpu_custom_call.1} parent=1 // loop_header_branch
      %34 = sbr.rel (%p32) target = $region8
    $region5: #{tpu_custom_call.1} parent=1 // loop_body
      %s36 = ssub.s32 %s31, 1
      %s37 = ssub.s32 %s31, 2
      %s38 = sadd.s32 %s31, 1
      %s40 = sadd.s32 %s39, 1
      %p43 = scmp.eq.s32.totalorder %s31, 1
      %p44 = scmp.ne.s32.totalorder %s39, %s41
      %p45 = scmp.eq.s32.totalorder %s31, 0
      %p46 = por %p44, %p45
      %p47 = scmp.ne.s32.totalorder %s39, %s41
      %p48 = scmp.eq.s32.totalorder %s36, 1
      %p49 = por %p47, %p48
      %p50 = scmp.ne.s32.totalorder %s41, %s42
      %p51 = scmp.eq.s32.totalorder %s36, 0
      %p52 = por %p50, %p51
      %p53 = scmp.ne.s32.totalorder %s41, %s42
      %p54 = scmp.eq.s32.totalorder %s37, 1
      %p55 = por %p53, %p54
      %p57 = scmp.ne.s32.totalorder %s42, %s56
      %p58 = scmp.eq.s32.totalorder %s37, 0
      %p59 = por %p57, %p58
      %s61 = sadd.s32 %s60, 1
      %p64 = scmp.eq.s32.totalorder %s31, 1
      %p65 = scmp.ne.s32.totalorder %s60, %s62
      %p66 = scmp.eq.s32.totalorder %s31, 0
      %p67 = por %p65, %p66
      %p68 = scmp.ne.s32.totalorder %s60, %s62
      %p69 = scmp.eq.s32.totalorder %s36, 1
      %p70 = por %p68, %p69
      %p71 = scmp.ne.s32.totalorder %s62, %s63
      %p72 = scmp.eq.s32.totalorder %s36, 0
      %p73 = por %p71, %p72
      %p74 = scmp.ne.s32.totalorder %s62, %s63
      %p75 = scmp.eq.s32.totalorder %s37, 1
      %p76 = por %p74, %p75
      %p78 = scmp.ne.s32.totalorder %s63, %s77
      %p79 = scmp.eq.s32.totalorder %s37, 0
      %p80 = por %p78, %p79
      %s81 = ssub.s32 %s31, %s38
      %p82 = scmp.eq.s32.totalorder %s81, 0
      %s84 = sadd.s32 %s83, 1
      %s85 = scalar_select %p82, %s83, %s84
      %p88 = pneg %p82
      %p89 = scmp.eq.s32.totalorder %s31, 1
      %p90 = por %p88, %p89
      %p91 = scmp.ne.s32.totalorder %s83, %s86
      %p92 = scmp.eq.s32.totalorder %s31, 0
      %p93 = por %p91, %p92
      %p94 = scmp.ne.s32.totalorder %s83, %s86
      %p95 = scmp.eq.s32.totalorder %s36, 1
      %p96 = por %p94, %p95
      %p97 = scmp.ne.s32.totalorder %s86, %s87
      %p98 = scmp.eq.s32.totalorder %s36, 0
      %p99 = por %p97, %p98
      %p100 = scmp.ne.s32.totalorder %s86, %s87
      %p101 = scmp.eq.s32.totalorder %s37, 1
      %p102 = por %p100, %p101
      %p104 = scmp.ne.s32.totalorder %s87, %s103
      %p105 = scmp.eq.s32.totalorder %s37, 0
      %p106 = por %p104, %p105
      %s107 = ssub.s32 %s31, %s38
      %p108 = scmp.eq.s32.totalorder %s107, 0
      %s110 = sadd.s32 %s109, 1
      %s111 = scalar_select %p108, %s109, %s110
      %p114 = pneg %p108
      %p115 = scmp.eq.s32.totalorder %s31, 1
      %p116 = por %p114, %p115
      %p117 = scmp.ne.s32.totalorder %s109, %s112
      %p118 = scmp.eq.s32.totalorder %s31, 0
      %p119 = por %p117, %p118
      %p120 = scmp.ne.s32.totalorder %s109, %s112
      %p121 = scmp.eq.s32.totalorder %s36, 1
      %p122 = por %p120, %p121
      %p123 = scmp.ne.s32.totalorder %s112, %s113
      %p124 = scmp.eq.s32.totalorder %s36, 0
      %p125 = por %p123, %p124
      %p126 = scmp.ne.s32.totalorder %s112, %s113
      %p127 = scmp.eq.s32.totalorder %s37, 1
      %p128 = por %p126, %p127
      %p130 = scmp.ne.s32.totalorder %s113, %s129
      %p131 = scmp.eq.s32.totalorder %s37, 0
      %p132 = por %p130, %p131
      %s133 = ssub.s32 %s31, %s38
      %p134 = scmp.eq.s32.totalorder %s133, 0
      %s136 = sadd.s32 %s135, 1
      %s137 = scalar_select %p134, %s135, %s136
      %p140 = pneg %p134
      %p141 = scmp.eq.s32.totalorder %s31, 1
      %p142 = por %p140, %p141
      %p143 = scmp.ne.s32.totalorder %s135, %s138
      %p144 = scmp.eq.s32.totalorder %s31, 0
      %p145 = por %p143, %p144
      %p146 = scmp.ne.s32.totalorder %s135, %s138
      %p147 = scmp.eq.s32.totalorder %s36, 1
      %p148 = por %p146, %p147
      %p149 = scmp.ne.s32.totalorder %s138, %s139
      %p150 = scmp.eq.s32.totalorder %s36, 0
      %p151 = por %p149, %p150
      %p152 = scmp.ne.s32.totalorder %s138, %s139
      %p153 = scmp.eq.s32.totalorder %s37, 1
      %p154 = por %p152, %p153
      %p156 = scmp.ne.s32.totalorder %s139, %s155
      %p157 = scmp.eq.s32.totalorder %s37, 0
      %p158 = por %p156, %p157
      %s159 = ssub.s32 %s31, %s38
      %p160 = scmp.eq.s32.totalorder %s159, 0
      %s162 = sadd.s32 %s161, 1
      %s163 = scalar_select %p160, %s161, %s162
      %p166 = pneg %p160
      %p167 = scmp.eq.s32.totalorder %s31, 1
      %p168 = por %p166, %p167
      %p169 = scmp.ne.s32.totalorder %s161, %s164
      %p170 = scmp.eq.s32.totalorder %s31, 0
      %p171 = por %p169, %p170
      %p172 = scmp.ne.s32.totalorder %s161, %s164
      %p173 = scmp.eq.s32.totalorder %s36, 1
      %p174 = por %p172, %p173
      %p175 = scmp.ne.s32.totalorder %s164, %s165
      %p176 = scmp.eq.s32.totalorder %s36, 0
      %p177 = por %p175, %p176
      %p178 = scmp.ne.s32.totalorder %s164, %s165
      %p179 = scmp.eq.s32.totalorder %s37, 1
      %p180 = por %p178, %p179
      %p182 = scmp.ne.s32.totalorder %s165, %s181
      %p183 = scmp.eq.s32.totalorder %s37, 0
      %p184 = por %p182, %p183
      %s185 = ssub.s32 %s31, %s38
      %p186 = scmp.eq.s32.totalorder %s185, 0
      %s188 = sadd.s32 %s187, 1
      %s189 = scalar_select %p186, %s187, %s188
      %p192 = pneg %p186
      %p193 = scmp.eq.s32.totalorder %s31, 1
      %p194 = por %p192, %p193
      %p195 = scmp.ne.s32.totalorder %s187, %s190
      %p196 = scmp.eq.s32.totalorder %s31, 0
      %p197 = por %p195, %p196
      %p198 = scmp.ne.s32.totalorder %s187, %s190
      %p199 = scmp.eq.s32.totalorder %s36, 1
      %p200 = por %p198, %p199
      %p201 = scmp.ne.s32.totalorder %s190, %s191
      %p202 = scmp.eq.s32.totalorder %s36, 0
      %p203 = por %p201, %p202
      %p204 = scmp.ne.s32.totalorder %s190, %s191
      %p205 = scmp.eq.s32.totalorder %s37, 1
      %p206 = por %p204, %p205
      %p208 = scmp.ne.s32.totalorder %s191, %s207
      %p209 = scmp.eq.s32.totalorder %s37, 0
      %p210 = por %p208, %p209
      %s211 = ssub.s32 %s31, %s38
      %p212 = scmp.eq.s32.totalorder %s211, 0
      %s214 = sadd.s32 %s213, 1
      %s215 = scalar_select %p212, %s213, %s214
      %p218 = pneg %p212
      %p219 = scmp.eq.s32.totalorder %s31, 1
      %p220 = por %p218, %p219
      %p221 = scmp.ne.s32.totalorder %s213, %s216
      %p222 = scmp.eq.s32.totalorder %s31, 0
      %p223 = por %p221, %p222
      %p224 = scmp.ne.s32.totalorder %s213, %s216
      %p225 = scmp.eq.s32.totalorder %s36, 1
      %p226 = por %p224, %p225
      %p227 = scmp.ne.s32.totalorder %s216, %s217
      %p228 = scmp.eq.s32.totalorder %s36, 0
      %p229 = por %p227, %p228
      %p230 = scmp.ne.s32.totalorder %s216, %s217
      %p231 = scmp.eq.s32.totalorder %s37, 1
      %p232 = por %p230, %p231
      %p234 = scmp.ne.s32.totalorder %s217, %s233
      %p235 = scmp.eq.s32.totalorder %s37, 0
      %p236 = por %p234, %p235
      %s237 = ssub.s32 %s31, %s38
      %p238 = scmp.eq.s32.totalorder %s237, 0
      %s240 = sadd.s32 %s239, 1
      %s241 = scalar_select %p238, %s239, %s240
      %p244 = pneg %p238
      %p245 = scmp.eq.s32.totalorder %s31, 1
      %p246 = por %p244, %p245
      %p247 = scmp.ne.s32.totalorder %s239, %s242
      %p248 = scmp.eq.s32.totalorder %s31, 0
      %p249 = por %p247, %p248
      %p250 = scmp.ne.s32.totalorder %s239, %s242
      %p251 = scmp.eq.s32.totalorder %s36, 1
      %p252 = por %p250, %p251
      %p253 = scmp.ne.s32.totalorder %s242, %s243
      %p254 = scmp.eq.s32.totalorder %s36, 0
      %p255 = por %p253, %p254
      %p256 = scmp.ne.s32.totalorder %s242, %s243
      %p257 = scmp.eq.s32.totalorder %s37, 1
      %p258 = por %p256, %p257
      %p260 = scmp.ne.s32.totalorder %s243, %s259
      %p261 = scmp.eq.s32.totalorder %s37, 0
      %p262 = por %p260, %p261
      %s263 = ssub.s32 %s31, %s38
      %p264 = scmp.eq.s32.totalorder %s263, 0
      %s266 = sadd.s32 %s265, 1
      %s267 = scalar_select %p264, %s265, %s266
      %p270 = pneg %p264
      %p271 = scmp.eq.s32.totalorder %s31, 1
      %p272 = por %p270, %p271
      %p273 = scmp.ne.s32.totalorder %s265, %s268
      %p274 = scmp.eq.s32.totalorder %s31, 0
      %p275 = por %p273, %p274
      %p276 = scmp.ne.s32.totalorder %s265, %s268
      %p277 = scmp.eq.s32.totalorder %s36, 1
      %p278 = por %p276, %p277
      %p279 = scmp.ne.s32.totalorder %s268, %s269
      %p280 = scmp.eq.s32.totalorder %s36, 0
      %p281 = por %p279, %p280
      %p282 = scmp.ne.s32.totalorder %s268, %s269
      %p283 = scmp.eq.s32.totalorder %s37, 1
      %p284 = por %p282, %p283
      %p286 = scmp.ne.s32.totalorder %s269, %s285
      %p287 = scmp.eq.s32.totalorder %s37, 0
      %p288 = por %p286, %p287
      %p289 = scmp.le.s32.totalorder 1, %s31
      %p290 = scmp.lt.s32.totalorder %s31, 3
      %p291 = pnand %p289, %p290
      %p292 = pneg %p291
      // Predicated region
      $region9: #{tpu_custom_call.1} parent=5 // pred_check
        _
      $region10: #{tpu_custom_call.1} parent=5 // pred_check_branch
        %294 = sbr.rel (%p291) target = $region12
      $region11: #{tpu_custom_call.1} parent=5 // pred_region
        %s295 = ssub.s32 %s31, 1
        // Predicated region
        $region13: #{tpu_custom_call.1} parent=11 // pred_check
          %p296 = pneg %p52
        $region14: #{tpu_custom_call.1} parent=11 // pred_check_branch
          %298 = sbr.rel (%p296) target = $region16
        $region15: #{tpu_custom_call.1} parent=11 // pred_region
          _
        $region16: #{tpu_custom_call.1} parent=11 // pred_fallthru
          _
        // Predicated region
        $region17: #{tpu_custom_call.1} parent=11 // pred_check
          %p299 = pneg %p73
        $region18: #{tpu_custom_call.1} parent=11 // pred_check_branch
          %301 = sbr.rel (%p299) target = $region20
        $region19: #{tpu_custom_call.1} parent=11 // pred_region
          _
        $region20: #{tpu_custom_call.1} parent=11 // pred_fallthru
          _
      $region12: #{tpu_custom_call.1} parent=5 // pred_fallthru
        _
      %p302 = scmp.lt.s32.totalorder %s31, 2
      // Predicated region
      $region21: #{tpu_custom_call.1} parent=5 // pred_check
        %p303 = pneg %p302
      $region22: #{tpu_custom_call.1} parent=5 // pred_check_branch
        %305 = sbr.rel (%p303) target = $region24
      $region23: #{tpu_custom_call.1} parent=5 // pred_region
        // Predicated region
        $region25: #{tpu_custom_call.1} parent=23 // pred_check
          %p306 = pneg %p93
        $region26: #{tpu_custom_call.1} parent=23 // pred_check_branch
          %308 = sbr.rel (%p306) target = $region28
        $region27: #{tpu_custom_call.1} parent=23 // pred_region
          %s309 = sand.u32 %s83, 1
          %s310 = scalar_lea.sflag [#allocation3], %s309
          %s311 = sand.u32 %s83, 1
          %s312 = smul.addr %s311, 32
          %s313 = scalar_lea.vmem [#allocation2], %s312
          %s315 = ssub.s32 512, 512
          %316 = vsyncadd %s310, %s315
          %s317 = smul.addr %s31, 8
          %s318 = smul.addr %s317, 64
          %s319 = scalar_lea.hbm %s2, %s318
          %s320 = sshll.u32 %s313, 4
          %s321 = int_to_ptr.vmem [resolvable:$true] %s320
          %326 = dma.hbm_to_vmem [thread:$0]  %s319, 512, %s321, %s310, 64, 64, 4
        $region28: #{tpu_custom_call.1} parent=23 // pred_fallthru
          _
        // Predicated region
        $region29: #{tpu_custom_call.1} parent=23 // pred_check
          %p327 = pneg %p119
        $region30: #{tpu_custom_call.1} parent=23 // pred_check_branch
          %329 = sbr.rel (%p327) target = $region32
        $region31: #{tpu_custom_call.1} parent=23 // pred_region
          %s330 = sand.u32 %s31, 1
          %s331 = scalar_lea.sflag [#allocation6], %s330
          %s332 = sand.u32 %s109, 1
          %s333 = smul.addr %s332, 32
          %s334 = scalar_lea.vmem [#allocation5], %s333
          %s336 = ssub.s32 512, 512
          %337 = vsyncadd %s331, %s336
          %s338 = smul.addr %s31, 8
          %s339 = smul.addr %s338, 64
          %s340 = scalar_lea.hbm %s3, %s339
          %s341 = sshll.u32 %s334, 4
          %s342 = int_to_ptr.vmem [resolvable:$true] %s341
          %347 = dma.hbm_to_vmem [thread:$0]  %s340, 512, %s342, %s331, 64, 64, 4
        $region32: #{tpu_custom_call.1} parent=23 // pred_fallthru
          _
        // Predicated region
        $region33: #{tpu_custom_call.1} parent=23 // pred_check
          %p348 = pneg %p145
        $region34: #{tpu_custom_call.1} parent=23 // pred_check_branch
          %350 = sbr.rel (%p348) target = $region36
        $region35: #{tpu_custom_call.1} parent=23 // pred_region
          %s351 = sand.u32 %s31, 1
          %s352 = scalar_lea.sflag [#allocation6], %s351
          %s353 = sand.u32 %s135, 1
          %s354 = smul.addr %s353, 32
          %s355 = scalar_lea.vmem [#allocation7], %s354
          %s357 = ssub.s32 512, 512
          %358 = vsyncadd %s352, %s357
          %s359 = smul.addr %s31, 8
          %s360 = smul.addr %s359, 64
          %s361 = scalar_lea.hbm %s4, %s360
          %s362 = sshll.u32 %s355, 4
          %s363 = int_to_ptr.vmem [resolvable:$true] %s362
          %368 = dma.hbm_to_vmem [thread:$0]  %s361, 512, %s363, %s352, 64, 64, 4
        $region36: #{tpu_custom_call.1} parent=23 // pred_fallthru
          _
        // Predicated region
        $region37: #{tpu_custom_call.1} parent=23 // pred_check
          %p369 = pneg %p171
        $region38: #{tpu_custom_call.1} parent=23 // pred_check_branch
          %371 = sbr.rel (%p369) target = $region40
        $region39: #{tpu_custom_call.1} parent=23 // pred_region
          %p372 = scmp.lt.s32.totalorder %s31, 1
          %s373 = scalar_select %p372, %s31, 1
          %s374 = smul.addr %s373, 8
          %s375 = scalar_lea.vmem %s5, %s374
        $region40: #{tpu_custom_call.1} parent=23 // pred_fallthru
          _
      $region24: #{tpu_custom_call.1} parent=5 // pred_fallthru
        _
      %p376 = scmp.le.s32.totalorder 1, %s31
      %p377 = scmp.lt.s32.totalorder %s31, 3
      %p378 = pnand %p376, %p377
      %p379 = pneg %p378
      // Predicated region
      $region41: #{tpu_custom_call.1} parent=5 // pred_check
        _
      $region42: #{tpu_custom_call.1} parent=5 // pred_check_branch
        %381 = sbr.rel (%p378) target = $region44
      $region43: #{tpu_custom_call.1} parent=5 // pred_region
        %s382 = ssub.s32 %s31, 1
        %s383 = sand.u32 %s86, 1
        %s384 = scalar_lea.sflag [#allocation3], %s383
        %s385 = sand.u32 %s86, 1
        %s386 = smul.addr %s385, 32
        %s387 = scalar_lea.vmem [#allocation2], %s386
        // Predicated region
        $region45: #{tpu_custom_call.1} parent=43 // pred_check
          %p388 = pneg %p99
        $region46: #{tpu_custom_call.1} parent=43 // pred_check_branch
          %390 = sbr.rel (%p388) target = $region48
        $region47: #{tpu_custom_call.1} parent=43 // pred_region
          %391 = dma.done %s384, 512
        $region48: #{tpu_custom_call.1} parent=43 // pred_fallthru
          _
        %s392 = sand.u32 %s36, 1
        %s393 = scalar_lea.sflag [#allocation6], %s392
        %s394 = sand.u32 %s112, 1
        %s395 = smul.addr %s394, 32
        %s396 = scalar_lea.vmem [#allocation5], %s395
        // Predicated region
        $region49: #{tpu_custom_call.1} parent=43 // pred_check
          %p397 = pneg %p125
        $region50: #{tpu_custom_call.1} parent=43 // pred_check_branch
          %399 = sbr.rel (%p397) target = $region52
        $region51: #{tpu_custom_call.1} parent=43 // pred_region
          %400 = dma.done %s393, 512
        $region52: #{tpu_custom_call.1} parent=43 // pred_fallthru
          _
        %s401 = sand.u32 %s36, 1
        %s402 = scalar_lea.sflag [#allocation6], %s401
        %s403 = sand.u32 %s138, 1
        %s404 = smul.addr %s403, 32
        %s405 = scalar_lea.vmem [#allocation7], %s404
        // Predicated region
        $region53: #{tpu_custom_call.1} parent=43 // pred_check
          %p406 = pneg %p151
        $region54: #{tpu_custom_call.1} parent=43 // pred_check_branch
          %408 = sbr.rel (%p406) target = $region56
        $region55: #{tpu_custom_call.1} parent=43 // pred_region
          %409 = dma.done %s402, 512
        $region56: #{tpu_custom_call.1} parent=43 // pred_fallthru
          _
        %p410 = pneg %p52
        %p411 = pneg %p49
        %p412 = pneg %p73
        %p413 = pneg %p70
        %s414 = sand.u32 %s86, 1
        %s415 = scalar_lea.sflag [#allocation3], %s414
        %s416 = sand.u32 %s86, 1
        %s417 = smul.addr %s416, 32
        %s418 = scalar_lea.vmem [#allocation2], %s417
        %p419 = pneg %p99
        %p420 = pneg %p96
        %s421 = sand.u32 %s36, 1
        %s422 = scalar_lea.sflag [#allocation6], %s421
        %s423 = sand.u32 %s112, 1
        %s424 = smul.addr %s423, 32
        %s425 = scalar_lea.vmem [#allocation5], %s424
        %p426 = pneg %p125
        %p427 = pneg %p122
        %s428 = sand.u32 %s36, 1
        %s429 = scalar_lea.sflag [#allocation6], %s428
        %s430 = sand.u32 %s138, 1
        %s431 = smul.addr %s430, 32
        %s432 = scalar_lea.vmem [#allocation7], %s431
        %p433 = pneg %p151
        %p434 = pneg %p148
        %p435 = scmp.lt.s32.totalorder %s36, 1
        %s436 = scalar_select %p435, %s36, 1
        %s437 = smul.addr %s436, 8
        %s438 = scalar_lea.vmem %s5, %s437
        %p439 = pneg %p177
        %p440 = pneg %p174
        %p441 = pneg %p203
        %p442 = pneg %p200
        %s443 = sand.u32 %s190, 1
        %s444 = scalar_lea.sflag [#allocation4], %s443
        %s445 = sand.u32 %s190, 1
        %s446 = smul.addr %s445, 32
        %s447 = scalar_lea.vmem [#allocation8], %s446
        %p448 = pneg %p229
        %p449 = pneg %p226
        %s450 = sand.u32 %s36, 1
        %s451 = scalar_lea.sflag [#allocation10], %s450
        %s452 = sand.u32 %s216, 1
        %s453 = smul.addr %s452, 32
        %s454 = scalar_lea.vmem [#allocation9], %s453
        %p455 = pneg %p255
        %p456 = pneg %p252
        %s457 = sand.u32 %s36, 1
        %s458 = scalar_lea.sflag [#allocation10], %s457
        %s459 = sand.u32 %s242, 1
        %s460 = smul.addr %s459, 32
        %s461 = scalar_lea.vmem [#allocation11], %s460
        %p462 = pneg %p281
        %p463 = pneg %p278
        %s464 = sand.u32 %s268, 1
        %s465 = scalar_lea.sflag [#allocation13], %s464
        %s466 = sand.u32 %s268, 1
        %s467 = smul.addr %s466, 4
        %s468 = scalar_lea.vmem [#allocation12], %s467
        %p469 = scmp.lt.s32.totalorder %s36, 1
        %s470 = scalar_select %p469, %s36, 1
        %s471 = smul.addr %s470, 8
        %s472 = scalar_lea.vmem %s5, %s471
        %v474 = vld [vmem:[%s387] sm:$0xf]
        %v475 = vld [vmem:[%s387 + $0x4] sm:$0xf]
        %v476 = vld [vmem:[%s387 + $0x8] sm:$0xf]
        %v477 = vld [vmem:[%s387 + $0xc] sm:$0xf]
        %v478 = vld [vmem:[%s387 + $0x10] sm:$0xf]
        %v479 = vld [vmem:[%s387 + $0x14] sm:$0xf]
        %v480 = vld [vmem:[%s387 + $0x18] sm:$0xf]
        %v481 = vld [vmem:[%s387 + $0x1c] sm:$0xf]
        %v482 = vmul.f32 %v474, 0.17677669
        %v483 = vmul.f32 %v475, 0.17677669
        %v484 = vmul.f32 %v476, 0.17677669
        %v485 = vmul.f32 %v477, 0.17677669
        %v486 = vmul.f32 %v478, 0.17677669
        %v487 = vmul.f32 %v479, 0.17677669
        %v488 = vmul.f32 %v480, 0.17677669
        %v489 = vmul.f32 %v481, 0.17677669
        %v490 = vcombine.low %v482, %v484
        %v492 = vunpack.c.l.s4 1983009808
        %v493 = vunpack.c.0.s8 %v492
        %v494 = vlaneseq
        %v495 = vshrl.u32 %v494, 7
        %v496 = vsub.s32 %v493, %v495
        %v497 = vrot.slane %v490, %v496
        %v498 = vcombine.low %v483, %v485
        %v500 = vunpack.c.l.s4 1983009808
        %v501 = vunpack.c.0.s8 %v500
        %v502 = vlaneseq
        %v503 = vshrl.u32 %v502, 7
        %v504 = vsub.s32 %v501, %v503
        %v505 = vrot.slane %v498, %v504
        %v506 = vcombine.low %v486, %v488
        %v508 = vunpack.c.l.s4 1983009808
        %v509 = vunpack.c.0.s8 %v508
        %v510 = vlaneseq
        %v511 = vshrl.u32 %v510, 7
        %v512 = vsub.s32 %v509, %v511
        %v513 = vrot.slane %v506, %v512
        %v514 = vcombine.low %v487, %v489
        %v516 = vunpack.c.l.s4 1983009808
        %v517 = vunpack.c.0.s8 %v516
        %v518 = vlaneseq
        %v519 = vshrl.u32 %v518, 7
        %v520 = vsub.s32 %v517, %v519
        %v521 = vrot.slane %v514, %v520
        %v522 = vcombine.low %v497, %v505
        %v523 = vcombine.high %v497, %v505
        %v525 = vunpack.c.l.s4 1934713408
        %v526 = vunpack.c.0.s8 %v525
        %v527 = vlaneseq
        %v528 = vshrl.u32 %v527, 7
        %v529 = vsub.s32 %v526, %v528
        %v530 = vrot.slane %v522, %v529
        %v532 = vunpack.c.l.s4 1934713408
        %v533 = vunpack.c.0.s8 %v532
        %v534 = vlaneseq
        %v535 = vshrl.u32 %v534, 7
        %v536 = vsub.s32 %v533, %v535
        %v537 = vrot.slane %v523, %v536
        %v538 = vcombine.low %v513, %v521
        %v539 = vcombine.high %v513, %v521
        %v541 = vunpack.c.l.s4 1934713408
        %v542 = vunpack.c.0.s8 %v541
        %v543 = vlaneseq
        %v544 = vshrl.u32 %v543, 7
        %v545 = vsub.s32 %v542, %v544
        %v546 = vrot.slane %v538, %v545
        %v548 = vunpack.c.l.s4 1934713408
        %v549 = vunpack.c.0.s8 %v548
        %v550 = vlaneseq
        %v551 = vshrl.u32 %v550, 7
        %v552 = vsub.s32 %v549, %v551
        %v553 = vrot.slane %v539, %v552
        %v554 = vcombine.low %v530, %v546
        %v555 = vcombine.high %v530, %v546
        %v556 = vcombine.low %v537, %v553
        %v557 = vcombine.high %v537, %v553
        %v558 = vld [vmem:[%s396] sm:$0xf]
        %v559 = vld [vmem:[%s396 + $0x4] sm:$0xf]
        %v560 = vld [vmem:[%s396 + $0x8] sm:$0xf]
        %v561 = vld [vmem:[%s396 + $0xc] sm:$0xf]
        %v562 = vld [vmem:[%s396 + $0x10] sm:$0xf]
        %v563 = vld [vmem:[%s396 + $0x14] sm:$0xf]
        %v564 = vld [vmem:[%s396 + $0x18] sm:$0xf]
        %v565 = vld [vmem:[%s396 + $0x1c] sm:$0xf]
        %v566 = vcombine.low %v558, %v560
        %v568 = vunpack.c.l.s4 1983009808
        %v569 = vunpack.c.0.s8 %v568
        %v570 = vlaneseq
        %v571 = vshrl.u32 %v570, 7
        %v572 = vsub.s32 %v569, %v571
        %v573 = vrot.slane %v566, %v572
        %v574 = vcombine.low %v559, %v561
        %v576 = vunpack.c.l.s4 1983009808
        %v577 = vunpack.c.0.s8 %v576
        %v578 = vlaneseq
        %v579 = vshrl.u32 %v578, 7
        %v580 = vsub.s32 %v577, %v579
        %v581 = vrot.slane %v574, %v580
        %v582 = vcombine.low %v562, %v564
        %v584 = vunpack.c.l.s4 1983009808
        %v585 = vunpack.c.0.s8 %v584
        %v586 = vlaneseq
        %v587 = vshrl.u32 %v586, 7
        %v588 = vsub.s32 %v585, %v587
        %v589 = vrot.slane %v582, %v588
        %v590 = vcombine.low %v563, %v565
        %v592 = vunpack.c.l.s4 1983009808
        %v593 = vunpack.c.0.s8 %v592
        %v594 = vlaneseq
        %v595 = vshrl.u32 %v594, 7
        %v596 = vsub.s32 %v593, %v595
        %v597 = vrot.slane %v590, %v596
        %v598 = vcombine.low %v573, %v581
        %v599 = vcombine.high %v573, %v581
        %v601 = vunpack.c.l.s4 1934713408
        %v602 = vunpack.c.0.s8 %v601
        %v603 = vlaneseq
        %v604 = vshrl.u32 %v603, 7
        %v605 = vsub.s32 %v602, %v604
        %v606 = vrot.slane %v598, %v605
        %v608 = vunpack.c.l.s4 1934713408
        %v609 = vunpack.c.0.s8 %v608
        %v610 = vlaneseq
        %v611 = vshrl.u32 %v610, 7
        %v612 = vsub.s32 %v609, %v611
        %v613 = vrot.slane %v599, %v612
        %v614 = vcombine.low %v589, %v597
        %v615 = vcombine.high %v589, %v597
        %v617 = vunpack.c.l.s4 1934713408
        %v618 = vunpack.c.0.s8 %v617
        %v619 = vlaneseq
        %v620 = vshrl.u32 %v619, 7
        %v621 = vsub.s32 %v618, %v620
        %v622 = vrot.slane %v614, %v621
        %v624 = vunpack.c.l.s4 1934713408
        %v625 = vunpack.c.0.s8 %v624
        %v626 = vlaneseq
        %v627 = vshrl.u32 %v626, 7
        %v628 = vsub.s32 %v625, %v627
        %v629 = vrot.slane %v615, %v628
        %v630 = vcombine.low %v606, %v622
        %v631 = vcombine.high %v606, %v622
        %v632 = vcombine.low %v613, %v629
        %v633 = vcombine.high %v613, %v629
        %v634 = vld [vmem:[%s405] sm:$0xf]
        %v635 = vld [vmem:[%s405 + $0x4] sm:$0xf]
        %v636 = vld [vmem:[%s405 + $0x8] sm:$0xf]
        %v637 = vld [vmem:[%s405 + $0xc] sm:$0xf]
        %v638 = vld [vmem:[%s405 + $0x10] sm:$0xf]
        %v639 = vld [vmem:[%s405 + $0x14] sm:$0xf]
        %v640 = vld [vmem:[%s405 + $0x18] sm:$0xf]
        %v641 = vld [vmem:[%s405 + $0x1c] sm:$0xf]
        %v642 = vcombine.low %v634, %v636
        %v644 = vunpack.c.l.s4 1983009808
        %v645 = vunpack.c.0.s8 %v644
        %v646 = vlaneseq
        %v647 = vshrl.u32 %v646, 7
        %v648 = vsub.s32 %v645, %v647
        %v649 = vrot.slane %v642, %v648
        %v650 = vcombine.low %v635, %v637
        %v652 = vunpack.c.l.s4 1983009808
        %v653 = vunpack.c.0.s8 %v652
        %v654 = vlaneseq
        %v655 = vshrl.u32 %v654, 7
        %v656 = vsub.s32 %v653, %v655
        %v657 = vrot.slane %v650, %v656
        %v658 = vcombine.low %v638, %v640
        %v660 = vunpack.c.l.s4 1983009808
        %v661 = vunpack.c.0.s8 %v660
        %v662 = vlaneseq
        %v663 = vshrl.u32 %v662, 7
        %v664 = vsub.s32 %v661, %v663
        %v665 = vrot.slane %v658, %v664
        %v666 = vcombine.low %v639, %v641
        %v668 = vunpack.c.l.s4 1983009808
        %v669 = vunpack.c.0.s8 %v668
        %v670 = vlaneseq
        %v671 = vshrl.u32 %v670, 7
        %v672 = vsub.s32 %v669, %v671
        %v673 = vrot.slane %v666, %v672
        %v674 = vcombine.low %v649, %v657
        %v675 = vcombine.high %v649, %v657
        %v677 = vunpack.c.l.s4 1934713408
        %v678 = vunpack.c.0.s8 %v677
        %v679 = vlaneseq
        %v680 = vshrl.u32 %v679, 7
        %v681 = vsub.s32 %v678, %v680
        %v682 = vrot.slane %v674, %v681
        %v684 = vunpack.c.l.s4 1934713408
        %v685 = vunpack.c.0.s8 %v684
        %v686 = vlaneseq
        %v687 = vshrl.u32 %v686, 7
        %v688 = vsub.s32 %v685, %v687
        %v689 = vrot.slane %v675, %v688
        %v690 = vcombine.low %v665, %v673
        %v691 = vcombine.high %v665, %v673
        %v693 = vunpack.c.l.s4 1934713408
        %v694 = vunpack.c.0.s8 %v693
        %v695 = vlaneseq
        %v696 = vshrl.u32 %v695, 7
        %v697 = vsub.s32 %v694, %v696
        %v698 = vrot.slane %v690, %v697
        %v700 = vunpack.c.l.s4 1934713408
        %v701 = vunpack.c.0.s8 %v700
        %v702 = vlaneseq
        %v703 = vshrl.u32 %v702, 7
        %v704 = vsub.s32 %v701, %v703
        %v705 = vrot.slane %v691, %v704
        %v706 = vcombine.low %v682, %v698
        %v707 = vcombine.high %v682, %v698
        %v708 = vcombine.low %v689, %v705
        %v709 = vcombine.high %v689, %v705
        %v710 = vpack.c.bf16 %v554, %v554
        %v711 = vpack.c.bf16 %v555, %v555
        %v712 = vpack.c.bf16 %v556, %v556
        %v713 = vpack.c.bf16 %v557, %v557
        %v714 = vpack.c.bf16 %v630, %v630
        %v715 = vpack.c.bf16 %v631, %v631
        %v716 = vpack.c.bf16 %v632, %v632
        %v717 = vpack.c.bf16 %v633, %v633
        %v718 = vld [vmem:[%s1] sm:$0xff]
        %vm719 = vcmask 261120
        %v721 = vsel %vm719, %v710, 0
        %v724 = vsel %vm719, %v714, 0
        %726 = vmatprep.subr.bf16.mxu0 0
        %727 = vmatpush1.bf16.xpose.msra.mxu0 %v724
        %728 = vmatprep.subr.bf16.mxu0 0
        %729 = vmatpush1.bf16.xpose.msra.mxu0 0
        %730 = vmatprep.subr.bf16.mxu0 0
        %731 = vmatpush1.bf16.xpose.msra.mxu0 0
        %732 = vmatprep.subr.bf16.mxu0 0
        %733 = vmatpush1.bf16.xpose.msra.mxu0 0
        %734 = vmatprep.subr.bf16.mxu0 0
        %735 = vmatpush1.bf16.xpose.msra.mxu0 0
        %736 = vmatprep.subr.bf16.mxu0 0
        %737 = vmatpush1.bf16.xpose.msra.mxu0 0
        %738 = vmatprep.subr.bf16.mxu0 0
        %739 = vmatpush1.bf16.xpose.msra.mxu0 0
        %740 = vmatprep.subr.bf16.mxu0 0
        %741 = vmatpush1.bf16.xpose.msra.mxu0 0
        %742 = vmatprep.subr.bf16.mxu0 0
        %743 = vmatpush1.bf16.xpose.msra.mxu0 0
        %744 = vmatprep.subr.bf16.mxu0 0
        %745 = vmatpush1.bf16.xpose.msra.mxu0 0
        %746 = vmatprep.subr.bf16.mxu0 0
        %747 = vmatpush1.bf16.xpose.msra.mxu0 0
        %748 = vmatprep.subr.bf16.mxu0 0
        %749 = vmatpush1.bf16.xpose.msra.mxu0 0
        %750 = vmatprep.subr.bf16.mxu0 0
        %751 = vmatpush1.bf16.xpose.msra.mxu0 0
        %752 = vmatprep.subr.bf16.mxu0 0
        %753 = vmatpush1.bf16.xpose.msra.mxu0 0
        %754 = vmatprep.subr.bf16.mxu0 0
        %755 = vmatpush1.bf16.xpose.msra.mxu0 0
        %756 = vmatprep.subr.bf16.mxu0 0
        %757 = vmatpush1.bf16.xpose.msra.mxu0 0
        %758 = vmatprep.mubr.bf16.mxu0 0
        %759 = vmatmul.mubr.bf16.gmra.mrb[0].mxu0 %v721
        %v760 = vpop.f32.mrb[0].mxu0
        %v761 = vadd.f32 %v718, %v760
        %v762 = vpop.f32.mrb[0].mxu0
        %v763 = vpop.f32.mrb[0].mxu0
        %v764 = vpop.f32.mrb[0].mxu0
        %765 = vdwg.mxu0
        %v767 = vsel %vm719, %v711, 0
        %v770 = vsel %vm719, %v715, 0
        %772 = vmatprep.subr.bf16.mxu0 0
        %773 = vmatpush1.bf16.xpose.msra.mxu0 %v770
        %774 = vmatprep.subr.bf16.mxu0 0
        %775 = vmatpush1.bf16.xpose.msra.mxu0 0
        %776 = vmatprep.subr.bf16.mxu0 0
        %777 = vmatpush1.bf16.xpose.msra.mxu0 0
        %778 = vmatprep.subr.bf16.mxu0 0
        %779 = vmatpush1.bf16.xpose.msra.mxu0 0
        %780 = vmatprep.subr.bf16.mxu0 0
        %781 = vmatpush1.bf16.xpose.msra.mxu0 0
        %782 = vmatprep.subr.bf16.mxu0 0
        %783 = vmatpush1.bf16.xpose.msra.mxu0 0
        %784 = vmatprep.subr.bf16.mxu0 0
        %785 = vmatpush1.bf16.xpose.msra.mxu0 0
        %786 = vmatprep.subr.bf16.mxu0 0
        %787 = vmatpush1.bf16.xpose.msra.mxu0 0
        %788 = vmatprep.subr.bf16.mxu0 0
        %789 = vmatpush1.bf16.xpose.msra.mxu0 0
        %790 = vmatprep.subr.bf16.mxu0 0
        %791 = vmatpush1.bf16.xpose.msra.mxu0 0
        %792 = vmatprep.subr.bf16.mxu0 0
        %793 = vmatpush1.bf16.xpose.msra.mxu0 0
        %794 = vmatprep.subr.bf16.mxu0 0
        %795 = vmatpush1.bf16.xpose.msra.mxu0 0
        %796 = vmatprep.subr.bf16.mxu0 0
        %797 = vmatpush1.bf16.xpose.msra.mxu0 0
        %798 = vmatprep.subr.bf16.mxu0 0
        %799 = vmatpush1.bf16.xpose.msra.mxu0 0
        %800 = vmatprep.subr.bf16.mxu0 0
        %801 = vmatpush1.bf16.xpose.msra.mxu0 0
        %802 = vmatprep.subr.bf16.mxu0 0
        %803 = vmatpush1.bf16.xpose.msra.mxu0 0
        %804 = vmatprep.mubr.bf16.mxu0 0
        %805 = vmatmul.mubr.bf16.gmra.mrb[0].mxu0 %v767
        %v806 = vpop.f32.mrb[0].mxu0
        %v807 = vadd.f32 %v718, %v806
        %v808 = vpop.f32.mrb[0].mxu0
        %v809 = vpop.f32.mrb[0].mxu0
        %v810 = vpop.f32.mrb[0].mxu0
        %811 = vdwg.mxu0
        %v813 = vsel %vm719, %v712, 0
        %v816 = vsel %vm719, %v716, 0
        %818 = vmatprep.subr.bf16.mxu0 0
        %819 = vmatpush1.bf16.xpose.msra.mxu0 %v816
        %820 = vmatprep.subr.bf16.mxu0 0
        %821 = vmatpush1.bf16.xpose.msra.mxu0 0
        %822 = vmatprep.subr.bf16.mxu0 0
        %823 = vmatpush1.bf16.xpose.msra.mxu0 0
        %824 = vmatprep.subr.bf16.mxu0 0
        %825 = vmatpush1.bf16.xpose.msra.mxu0 0
        %826 = vmatprep.subr.bf16.mxu0 0
        %827 = vmatpush1.bf16.xpose.msra.mxu0 0
        %828 = vmatprep.subr.bf16.mxu0 0
        %829 = vmatpush1.bf16.xpose.msra.mxu0 0
        %830 = vmatprep.subr.bf16.mxu0 0
        %831 = vmatpush1.bf16.xpose.msra.mxu0 0
        %832 = vmatprep.subr.bf16.mxu0 0
        %833 = vmatpush1.bf16.xpose.msra.mxu0 0
        %834 = vmatprep.subr.bf16.mxu0 0
        %835 = vmatpush1.bf16.xpose.msra.mxu0 0
        %836 = vmatprep.subr.bf16.mxu0 0
        %837 = vmatpush1.bf16.xpose.msra.mxu0 0
        %838 = vmatprep.subr.bf16.mxu0 0
        %839 = vmatpush1.bf16.xpose.msra.mxu0 0
        %840 = vmatprep.subr.bf16.mxu0 0
        %841 = vmatpush1.bf16.xpose.msra.mxu0 0
        %842 = vmatprep.subr.bf16.mxu0 0
        %843 = vmatpush1.bf16.xpose.msra.mxu0 0
        %844 = vmatprep.subr.bf16.mxu0 0
        %845 = vmatpush1.bf16.xpose.msra.mxu0 0
        %846 = vmatprep.subr.bf16.mxu0 0
        %847 = vmatpush1.bf16.xpose.msra.mxu0 0
        %848 = vmatprep.subr.bf16.mxu0 0
        %849 = vmatpush1.bf16.xpose.msra.mxu0 0
        %850 = vmatprep.mubr.bf16.mxu0 0
        %851 = vmatmul.mubr.bf16.gmra.mrb[0].mxu0 %v813
        %v852 = vpop.f32.mrb[0].mxu0
        %v853 = vadd.f32 %v718, %v852
        %v854 = vpop.f32.mrb[0].mxu0
        %v855 = vpop.f32.mrb[0].mxu0
        %v856 = vpop.f32.mrb[0].mxu0
        %857 = vdwg.mxu0
        %v859 = vsel %vm719, %v713, 0
        %v862 = vsel %vm719, %v717, 0
        %864 = vmatprep.subr.bf16.mxu0 0
        %865 = vmatpush1.bf16.xpose.msra.mxu0 %v862
        %866 = vmatprep.subr.bf16.mxu0 0
        %867 = vmatpush1.bf16.xpose.msra.mxu0 0
        %868 = vmatprep.subr.bf16.mxu0 0
        %869 = vmatpush1.bf16.xpose.msra.mxu0 0
        %870 = vmatprep.subr.bf16.mxu0 0
        %871 = vmatpush1.bf16.xpose.msra.mxu0 0
        %872 = vmatprep.subr.bf16.mxu0 0
        %873 = vmatpush1.bf16.xpose.msra.mxu0 0
        %874 = vmatprep.subr.bf16.mxu0 0
        %875 = vmatpush1.bf16.xpose.msra.mxu0 0
        %876 = vmatprep.subr.bf16.mxu0 0
        %877 = vmatpush1.bf16.xpose.msra.mxu0 0
        %878 = vmatprep.subr.bf16.mxu0 0
        %879 = vmatpush1.bf16.xpose.msra.mxu0 0
        %880 = vmatprep.subr.bf16.mxu0 0
        %881 = vmatpush1.bf16.xpose.msra.mxu0 0
        %882 = vmatprep.subr.bf16.mxu0 0
        %883 = vmatpush1.bf16.xpose.msra.mxu0 0
        %884 = vmatprep.subr.bf16.mxu0 0
        %885 = vmatpush1.bf16.xpose.msra.mxu0 0
        %886 = vmatprep.subr.bf16.mxu0 0
        %887 = vmatpush1.bf16.xpose.msra.mxu0 0
        %888 = vmatprep.subr.bf16.mxu0 0
        %889 = vmatpush1.bf16.xpose.msra.mxu0 0
        %890 = vmatprep.subr.bf16.mxu0 0
        %891 = vmatpush1.bf16.xpose.msra.mxu0 0
        %892 = vmatprep.subr.bf16.mxu0 0
        %893 = vmatpush1.bf16.xpose.msra.mxu0 0
        %894 = vmatprep.subr.bf16.mxu0 0
        %895 = vmatpush1.bf16.xpose.msra.mxu0 0
        %896 = vmatprep.mubr.bf16.mxu0 0
        %897 = vmatmul.mubr.bf16.gmra.mrb[0].mxu0 %v859
        %v898 = vpop.f32.mrb[0].mxu0
        %v899 = vadd.f32 %v718, %v898
        %v900 = vpop.f32.mrb[0].mxu0
        %v901 = vpop.f32.mrb[0].mxu0
        %v902 = vpop.f32.mrb[0].mxu0
        %903 = vdwg.mxu0
        %vm904 = vcmask 64512
        %v905 = vsel %vm904, %v761, -inf
        %906 = vmax.xlane.f32.xlu0 %v905
        %v907 = vpop.xlane.xlu0 %906
        %v908 = vsel %vm904, %v807, -inf
        %909 = vmax.xlane.f32.xlu0 %v908
        %v910 = vpop.xlane.xlu0 %909
        %v911 = vsel %vm904, %v853, -inf
        %912 = vmax.xlane.f32.xlu0 %v911
        %v913 = vpop.xlane.xlu0 %912
        %v914 = vsel %vm904, %v899, -inf
        %915 = vmax.xlane.f32.xlu0 %v914
        %v916 = vpop.xlane.xlu0 %915
        %v917 = vsub.f32 %v761, %v907
        %v918 = vsub.f32 %v807, %v910
        %v919 = vsub.f32 %v853, %v913
        %v920 = vsub.f32 %v899, %v916
        %v921 = vmul.f32 %v917, 1.442695
        %v922 = vpow.pop %v921
        %v923 = vmul.f32 %v918, 1.442695
        %v924 = vpow.pop %v923
        %v925 = vmul.f32 %v919, 1.442695
        %v926 = vpow.pop %v925
        %v927 = vmul.f32 %v920, 1.442695
        %v928 = vpow.pop %v927
        %v929 = vsel %vm904, %v922, 0.0
        %930 = vadd.xlane.f32.xlu0 %v929
        %v931 = vpop.xlane.xlu0 %930
        %v932 = vsel %vm904, %v924, 0.0
        %933 = vadd.xlane.f32.xlu0 %v932
        %v934 = vpop.xlane.xlu0 %933
        %v935 = vsel %vm904, %v926, 0.0
        %936 = vadd.xlane.f32.xlu0 %v935
        %v937 = vpop.xlane.xlu0 %936
        %v938 = vsel %vm904, %v928, 0.0
        %939 = vadd.xlane.f32.xlu0 %v938
        %v940 = vpop.xlane.xlu0 %939
        %v941 = vrcp.pop %v931
        %v942 = vrcp.pop %v934
        %v943 = vrcp.pop %v937
        %v944 = vrcp.pop %v940
        %v945 = vmul.f32 %v922, %v941
        %v946 = vmul.f32 %v924, %v942
        %v947 = vmul.f32 %v926, %v943
        %v948 = vmul.f32 %v928, %v944
        %v949 = vpack.c.bf16 %v945, %v945
        %v950 = vpack.c.bf16 %v946, %v946
        %v951 = vpack.c.bf16 %v947, %v947
        %v952 = vpack.c.bf16 %v948, %v948
        %v953 = vpack.c.bf16 %v706, %v706
        %v954 = vpack.c.bf16 %v707, %v707
        %v955 = vpack.c.bf16 %v708, %v708
        %v956 = vpack.c.bf16 %v709, %v709
        %v958 = vsel %vm904, %v949, 0
        %vm960 = vcmask 1043456
        %v962 = vsel %vm960, %v953, 0
        %964 = vmatprep.subr.bf16.mxu0 0
        %965 = vmatpush1.bf16.msra.mxu0 %v962
        %966 = vmatprep.subr.bf16.mxu0 0
        %967 = vmatpush1.bf16.msra.mxu0 0
        %968 = vmatprep.subr.bf16.mxu0 0
        %969 = vmatpush1.bf16.msra.mxu0 0
        %970 = vmatprep.subr.bf16.mxu0 0
        %971 = vmatpush1.bf16.msra.mxu0 0
        %972 = vmatprep.subr.bf16.mxu0 0
        %973 = vmatpush1.bf16.msra.mxu0 0
        %974 = vmatprep.subr.bf16.mxu0 0
        %975 = vmatpush1.bf16.msra.mxu0 0
        %976 = vmatprep.subr.bf16.mxu0 0
        %977 = vmatpush1.bf16.msra.mxu0 0
        %978 = vmatprep.subr.bf16.mxu0 0
        %979 = vmatpush1.bf16.msra.mxu0 0
        %980 = vmatprep.subr.bf16.mxu0 0
        %981 = vmatpush1.bf16.msra.mxu0 0
        %982 = vmatprep.subr.bf16.mxu0 0
        %983 = vmatpush1.bf16.msra.mxu0 0
        %984 = vmatprep.subr.bf16.mxu0 0
        %985 = vmatpush1.bf16.msra.mxu0 0
        %986 = vmatprep.subr.bf16.mxu0 0
        %987 = vmatpush1.bf16.msra.mxu0 0
        %988 = vmatprep.subr.bf16.mxu0 0
        %989 = vmatpush1.bf16.msra.mxu0 0
        %990 = vmatprep.subr.bf16.mxu0 0
        %991 = vmatpush1.bf16.msra.mxu0 0
        %992 = vmatprep.subr.bf16.mxu0 0
        %993 = vmatpush1.bf16.msra.mxu0 0
        %994 = vmatprep.subr.bf16.mxu0 0
        %995 = vmatpush1.bf16.msra.mxu0 0
        %996 = vmatprep.mubr.bf16.mxu0 0
        %997 = vmatmul.mubr.bf16.gmra.mrb[0].mxu0 %v958
        %v998 = vpop.f32.mrb[0].mxu0
        %v999 = vadd.f32 0.0, %v998
        %v1000 = vpop.f32.mrb[0].mxu0
        %v1001 = vpop.f32.mrb[0].mxu0
        %v1002 = vpop.f32.mrb[0].mxu0
        %1003 = vdwg.mxu0
        %v1005 = vsel %vm904, %v950, 0
        %v1008 = vsel %vm960, %v954, 0
        %1010 = vmatprep.subr.bf16.mxu0 0
        %1011 = vmatpush1.bf16.msra.mxu0 %v1008
        %1012 = vmatprep.subr.bf16.mxu0 0
        %1013 = vmatpush1.bf16.msra.mxu0 0
        %1014 = vmatprep.subr.bf16.mxu0 0
        %1015 = vmatpush1.bf16.msra.mxu0 0
        %1016 = vmatprep.subr.bf16.mxu0 0
        %1017 = vmatpush1.bf16.msra.mxu0 0
        %1018 = vmatprep.subr.bf16.mxu0 0
        %1019 = vmatpush1.bf16.msra.mxu0 0
        %1020 = vmatprep.subr.bf16.mxu0 0
        %1021 = vmatpush1.bf16.msra.mxu0 0
        %1022 = vmatprep.subr.bf16.mxu0 0
        %1023 = vmatpush1.bf16.msra.mxu0 0
        %1024 = vmatprep.subr.bf16.mxu0 0
        %1025 = vmatpush1.bf16.msra.mxu0 0
        %1026 = vmatprep.subr.bf16.mxu0 0
        %1027 = vmatpush1.bf16.msra.mxu0 0
        %1028 = vmatprep.subr.bf16.mxu0 0
        %1029 = vmatpush1.bf16.msra.mxu0 0
        %1030 = vmatprep.subr.bf16.mxu0 0
        %1031 = vmatpush1.bf16.msra.mxu0 0
        %1032 = vmatprep.subr.bf16.mxu0 0
        %1033 = vmatpush1.bf16.msra.mxu0 0
        %1034 = vmatprep.subr.bf16.mxu0 0
        %1035 = vmatpush1.bf16.msra.mxu0 0
        %1036 = vmatprep.subr.bf16.mxu0 0
        %1037 = vmatpush1.bf16.msra.mxu0 0
        %1038 = vmatprep.subr.bf16.mxu0 0
        %1039 = vmatpush1.bf16.msra.mxu0 0
        %1040 = vmatprep.subr.bf16.mxu0 0
        %1041 = vmatpush1.bf16.msra.mxu0 0
        %1042 = vmatprep.mubr.bf16.mxu0 0
        %1043 = vmatmul.mubr.bf16.gmra.mrb[0].mxu0 %v1005
        %v1044 = vpop.f32.mrb[0].mxu0
        %v1045 = vadd.f32 0.0, %v1044
        %v1046 = vpop.f32.mrb[0].mxu0
        %v1047 = vpop.f32.mrb[0].mxu0
        %v1048 = vpop.f32.mrb[0].mxu0
        %1049 = vdwg.mxu0
        %v1051 = vsel %vm904, %v951, 0
        %v1054 = vsel %vm960, %v955, 0
        %1056 = vmatprep.subr.bf16.mxu0 0
        %1057 = vmatpush1.bf16.msra.mxu0 %v1054
        %1058 = vmatprep.subr.bf16.mxu0 0
        %1059 = vmatpush1.bf16.msra.mxu0 0
        %1060 = vmatprep.subr.bf16.mxu0 0
        %1061 = vmatpush1.bf16.msra.mxu0 0
        %1062 = vmatprep.subr.bf16.mxu0 0
        %1063 = vmatpush1.bf16.msra.mxu0 0
        %1064 = vmatprep.subr.bf16.mxu0 0
        %1065 = vmatpush1.bf16.msra.mxu0 0
        %1066 = vmatprep.subr.bf16.mxu0 0
        %1067 = vmatpush1.bf16.msra.mxu0 0
        %1068 = vmatprep.subr.bf16.mxu0 0
        %1069 = vmatpush1.bf16.msra.mxu0 0
        %1070 = vmatprep.subr.bf16.mxu0 0
        %1071 = vmatpush1.bf16.msra.mxu0 0
        %1072 = vmatprep.subr.bf16.mxu0 0
        %1073 = vmatpush1.bf16.msra.mxu0 0
        %1074 = vmatprep.subr.bf16.mxu0 0
        %1075 = vmatpush1.bf16.msra.mxu0 0
        %1076 = vmatprep.subr.bf16.mxu0 0
        %1077 = vmatpush1.bf16.msra.mxu0 0
        %1078 = vmatprep.subr.bf16.mxu0 0
        %1079 = vmatpush1.bf16.msra.mxu0 0
        %1080 = vmatprep.subr.bf16.mxu0 0
        %1081 = vmatpush1.bf16.msra.mxu0 0
        %1082 = vmatprep.subr.bf16.mxu0 0
        %1083 = vmatpush1.bf16.msra.mxu0 0
        %1084 = vmatprep.subr.bf16.mxu0 0
        %1085 = vmatpush1.bf16.msra.mxu0 0
        %1086 = vmatprep.subr.bf16.mxu0 0
        %1087 = vmatpush1.bf16.msra.mxu0 0
        %1088 = vmatprep.mubr.bf16.mxu0 0
        %1089 = vmatmul.mubr.bf16.gmra.mrb[0].mxu0 %v1051
        %v1090 = vpop.f32.mrb[0].mxu0
        %v1091 = vadd.f32 0.0, %v1090
        %v1092 = vpop.f32.mrb[0].mxu0
        %v1093 = vpop.f32.mrb[0].mxu0
        %v1094 = vpop.f32.mrb[0].mxu0
        %1095 = vdwg.mxu0
        %v1097 = vsel %vm904, %v952, 0
        %v1100 = vsel %vm960, %v956, 0
        %1102 = vmatprep.subr.bf16.mxu0 0
        %1103 = vmatpush1.bf16.msra.mxu0 %v1100
        %1104 = vmatprep.subr.bf16.mxu0 0
        %1105 = vmatpush1.bf16.msra.mxu0 0
        %1106 = vmatprep.subr.bf16.mxu0 0
        %1107 = vmatpush1.bf16.msra.mxu0 0
        %1108 = vmatprep.subr.bf16.mxu0 0
        %1109 = vmatpush1.bf16.msra.mxu0 0
        %1110 = vmatprep.subr.bf16.mxu0 0
        %1111 = vmatpush1.bf16.msra.mxu0 0
        %1112 = vmatprep.subr.bf16.mxu0 0
        %1113 = vmatpush1.bf16.msra.mxu0 0
        %1114 = vmatprep.subr.bf16.mxu0 0
        %1115 = vmatpush1.bf16.msra.mxu0 0
        %1116 = vmatprep.subr.bf16.mxu0 0
        %1117 = vmatpush1.bf16.msra.mxu0 0
        %1118 = vmatprep.subr.bf16.mxu0 0
        %1119 = vmatpush1.bf16.msra.mxu0 0
        %1120 = vmatprep.subr.bf16.mxu0 0
        %1121 = vmatpush1.bf16.msra.mxu0 0
        %1122 = vmatprep.subr.bf16.mxu0 0
        %1123 = vmatpush1.bf16.msra.mxu0 0
        %1124 = vmatprep.subr.bf16.mxu0 0
        %1125 = vmatpush1.bf16.msra.mxu0 0
        %1126 = vmatprep.subr.bf16.mxu0 0
        %1127 = vmatpush1.bf16.msra.mxu0 0
        %1128 = vmatprep.subr.bf16.mxu0 0
        %1129 = vmatpush1.bf16.msra.mxu0 0
        %1130 = vmatprep.subr.bf16.mxu0 0
        %1131 = vmatpush1.bf16.msra.mxu0 0
        %1132 = vmatprep.subr.bf16.mxu0 0
        %1133 = vmatpush1.bf16.msra.mxu0 0
        %1134 = vmatprep.mubr.bf16.mxu0 0
        %1135 = vmatmul.mubr.bf16.gmra.mrb[0].mxu0 %v1097
        %v1136 = vpop.f32.mrb[0].mxu0
        %v1137 = vadd.f32 0.0, %v1136
        %v1138 = vpop.f32.mrb[0].mxu0
        %v1139 = vpop.f32.mrb[0].mxu0
        %v1140 = vpop.f32.mrb[0].mxu0
        %1141 = vdwg.mxu0
        %v1142 = vld [vmem:[%s472] sm:$0xff]
        %v1143 = vmul.f32 %v1142, 5.0
        %v1144 = vxor.u32 %v1143, 2147483648
        %v1145 = vmul.f32 %v1144, 1.442695
        %v1146 = vpow.pop %v1145
        %v1147 = vadd.f32 %v1146, 1.0
        %v1148 = vrcp.pop %v1147
        %v1149 = vmul.f32 1.0, %v1148
        %v1150 = vadd.f32 %v1149, 1e-05
        %v1151 = vmul.f32 %v1150, 1.0986123
        %v1152 = vmul.f32 %v1151, 1.442695
        %v1153 = vpow.pop %v1152
        %v1154 = vsub.f32 %v1153, 1.0
        %1155 = vxpose.xlu0.b32.start [1/16] %v1154, 128
        %1156 = vxpose.xlu0.b32.cont [2/16] 0.0, 128
        %1157 = vxpose.xlu0.b32.cont [3/16] 0.0, 128
        %1158 = vxpose.xlu0.b32.cont [4/16] 0.0, 128
        %1159 = vxpose.xlu0.b32.cont [5/16] 0.0, 128
        %1160 = vxpose.xlu0.b32.cont [6/16] 0.0, 128
        %1161 = vxpose.xlu0.b32.cont [7/16] 0.0, 128
        %1162 = vxpose.xlu0.b32.cont [8/16] 0.0, 128
        %1163 = vxpose.xlu0.b32.cont [9/16] 0.0, 128
        %1164 = vxpose.xlu0.b32.cont [10/16] 0.0, 128
        %1165 = vxpose.xlu0.b32.cont [11/16] 0.0, 128
        %1166 = vxpose.xlu0.b32.cont [12/16] 0.0, 128
        %1167 = vxpose.xlu0.b32.cont [13/16] 0.0, 128
        %1168 = vxpose.xlu0.b32.cont [14/16] 0.0, 128
        %1169 = vxpose.xlu0.b32.cont [15/16] 0.0, 128
        %1170 = vxpose.xlu0.b32.end [16/16] 0.0, 128
        %v1171 = vpop.trf.xlu0
        %v1172 = vpop.trf.xlu0
        %v1173 = vpop.trf.xlu0
        %v1174 = vpop.trf.xlu0
        %v1175 = vpop.trf.xlu0
        %v1176 = vpop.trf.xlu0
        %v1177 = vpop.trf.xlu0
        %v1178 = vpop.trf.xlu0
        %v1179 = vpop.trf.xlu0
        %v1180 = vpop.trf.xlu0
        %v1181 = vpop.trf.xlu0
        %v1182 = vpop.trf.xlu0
        %v1183 = vpop.trf.xlu0
        %v1184 = vpop.trf.xlu0
        %v1185 = vpop.trf.xlu0
        %v1186 = vpop.trf.xlu0
        %v1187 = vrcp.pop %v1171
        %v1188 = vlaneseq
        %v1189 = vshrl.u32 %v1188, 7
        %v1190 = vsub.s32 0, %v1189
        %v1191 = vrot.slane %v1187, %v1190
        %1193 = vbcast.lane.b32.xlu0 %v1191, 256
        %v1194 = vpop.permute.xlu0 %1193
        %v1195 = vlaneseq
        %v1196 = vshrl.u32 %v1195, 7
        %v1197 = vsub.s32 1, %v1196
        %v1198 = vrot.slane %v1187, %v1197
        %1200 = vbcast.lane.b32.xlu0 %v1198, 256
        %v1201 = vpop.permute.xlu0 %1200
        %v1202 = vlaneseq
        %v1203 = vshrl.u32 %v1202, 7
        %v1204 = vsub.s32 2, %v1203
        %v1205 = vrot.slane %v1187, %v1204
        %1207 = vbcast.lane.b32.xlu0 %v1205, 256
        %v1208 = vpop.permute.xlu0 %1207
        %v1209 = vlaneseq
        %v1210 = vshrl.u32 %v1209, 7
        %v1211 = vsub.s32 3, %v1210
        %v1212 = vrot.slane %v1187, %v1211
        %1214 = vbcast.lane.b32.xlu0 %v1212, 256
        %v1215 = vpop.permute.xlu0 %1214
        %v1216 = vmul.f32 %v1194, 0.3989423
        %v1217 = vmul.f32 %v1201, 0.3989423
        %v1218 = vmul.f32 %v1208, 0.3989423
        %v1219 = vmul.f32 %v1215, 0.3989423
        %v1220 = vld [vmem:[%s0] sm:$0xff]
        %v1221 = vmul.f32 %v1194, %v1194
        %v1222 = vmul.f32 %v1201, %v1201
        %v1223 = vmul.f32 %v1208, %v1208
        %v1224 = vmul.f32 %v1215, %v1215
        %v1225 = vmul.f32 %v1220, %v1221
        %v1226 = vmul.f32 %v1220, %v1222
        %v1227 = vmul.f32 %v1220, %v1223
        %v1228 = vmul.f32 %v1220, %v1224
        %v1229 = vmul.f32 %v1225, 1.442695
        %v1230 = vpow.pop %v1229
        %v1231 = vmul.f32 %v1226, 1.442695
        %v1232 = vpow.pop %v1231
        %v1233 = vmul.f32 %v1227, 1.442695
        %v1234 = vpow.pop %v1233
        %v1235 = vmul.f32 %v1228, 1.442695
        %v1236 = vpow.pop %v1235
        %v1237 = vmul.f32 %v1216, %v1230
        %v1238 = vmul.f32 %v1217, %v1232
        %v1239 = vmul.f32 %v1218, %v1234
        %v1240 = vmul.f32 %v1219, %v1236
        %v1241 = vcombine.low %v999, %v1091
        %v1242 = vcombine.high %v999, %v1091
        %v1244 = vunpack.c.l.s4 1983009808
        %v1245 = vunpack.c.0.s8 %v1244
        %v1246 = vlaneseq
        %v1247 = vshrl.u32 %v1246, 7
        %v1248 = vsub.s32 %v1245, %v1247
        %v1249 = vrot.slane %v1241, %v1248
        %v1251 = vunpack.c.l.s4 1983009808
        %v1252 = vunpack.c.0.s8 %v1251
        %v1253 = vlaneseq
        %v1254 = vshrl.u32 %v1253, 7
        %v1255 = vsub.s32 %v1252, %v1254
        %v1256 = vrot.slane %v1242, %v1255
        %v1257 = vcombine.low %v1045, %v1137
        %v1258 = vcombine.high %v1045, %v1137
        %v1260 = vunpack.c.l.s4 1983009808
        %v1261 = vunpack.c.0.s8 %v1260
        %v1262 = vlaneseq
        %v1263 = vshrl.u32 %v1262, 7
        %v1264 = vsub.s32 %v1261, %v1263
        %v1265 = vrot.slane %v1257, %v1264
        %v1267 = vunpack.c.l.s4 1983009808
        %v1268 = vunpack.c.0.s8 %v1267
        %v1269 = vlaneseq
        %v1270 = vshrl.u32 %v1269, 7
        %v1271 = vsub.s32 %v1268, %v1270
        %v1272 = vrot.slane %v1258, %v1271
        %v1273 = vcombine.low %v1249, %v1265
        %v1274 = vcombine.high %v1249, %v1265
        %v1276 = vunpack.c.l.s4 1934713408
        %v1277 = vunpack.c.0.s8 %v1276
        %v1278 = vlaneseq
        %v1279 = vshrl.u32 %v1278, 7
        %v1280 = vsub.s32 %v1277, %v1279
        %v1281 = vrot.slane %v1273, %v1280
        %v1283 = vunpack.c.l.s4 1934713408
        %v1284 = vunpack.c.0.s8 %v1283
        %v1285 = vlaneseq
        %v1286 = vshrl.u32 %v1285, 7
        %v1287 = vsub.s32 %v1284, %v1286
        %v1288 = vrot.slane %v1274, %v1287
        %v1289 = vcombine.low %v1256, %v1272
        %v1290 = vcombine.high %v1256, %v1272
        %v1292 = vunpack.c.l.s4 1934713408
        %v1293 = vunpack.c.0.s8 %v1292
        %v1294 = vlaneseq
        %v1295 = vshrl.u32 %v1294, 7
        %v1296 = vsub.s32 %v1293, %v1295
        %v1297 = vrot.slane %v1289, %v1296
        %v1299 = vunpack.c.l.s4 1934713408
        %v1300 = vunpack.c.0.s8 %v1299
        %v1301 = vlaneseq
        %v1302 = vshrl.u32 %v1301, 7
        %v1303 = vsub.s32 %v1300, %v1302
        %v1304 = vrot.slane %v1290, %v1303
        %v1305 = vcombine.high %v1281, 0.0
        %v1306 = vcombine.high %v1288, 0.0
        %v1307 = vcombine.high %v1297, 0.0
        %v1308 = vcombine.high %v1304, 0.0
        %vm1309 = vcmask 257024
        %1310 = vst.msk [vmem:[%s447] sm:$0xf] %vm1309, %v1281
        %1311 = vst.msk [vmem:[%s447 + $0x4] sm:$0xf] %vm1309, %v1305
        %1312 = vst.msk [vmem:[%s447 + $0x8] sm:$0xf] %vm1309, %v1288
        %1313 = vst.msk [vmem:[%s447 + $0xc] sm:$0xf] %vm1309, %v1306
        %1314 = vst.msk [vmem:[%s447 + $0x10] sm:$0xf] %vm1309, %v1297
        %1315 = vst.msk [vmem:[%s447 + $0x14] sm:$0xf] %vm1309, %v1307
        %1316 = vst.msk [vmem:[%s447 + $0x18] sm:$0xf] %vm1309, %v1304
        %1317 = vst.msk [vmem:[%s447 + $0x1c] sm:$0xf] %vm1309, %v1308
        %1318 = vst.msk [vmem:[%s454] sm:$0xff] %vm904, %v945
        %1319 = vst.msk [vmem:[%s454 + $0x8] sm:$0xff] %vm904, %v946
        %1320 = vst.msk [vmem:[%s454 + $0x10] sm:$0xff] %vm904, %v947
        %1321 = vst.msk [vmem:[%s454 + $0x18] sm:$0xff] %vm904, %v948
        %1322 = vst.msk [vmem:[%s461] sm:$0xff] %vm904, %v1237
        %1323 = vst.msk [vmem:[%s461 + $0x8] sm:$0xff] %vm904, %v1238
        %1324 = vst.msk [vmem:[%s461 + $0x10] sm:$0xff] %vm904, %v1239
        %1325 = vst.msk [vmem:[%s461 + $0x18] sm:$0xff] %vm904, %v1240
        %vm1326 = vcmask 60416
        %1327 = vst.msk [vmem:[%s468] sm:$0xf] %vm1326, %v1171
        %s1328 = sand.u32 %s190, 1
        %s1329 = scalar_lea.sflag [#allocation4], %s1328
        %s1330 = sand.u32 %s190, 1
        %s1331 = smul.addr %s1330, 32
        %s1332 = scalar_lea.vmem [#allocation8], %s1331
        %s1333 = sand.u32 %s36, 1
        %s1334 = scalar_lea.sflag [#allocation10], %s1333
        %s1335 = sand.u32 %s216, 1
        %s1336 = smul.addr %s1335, 32
        %s1337 = scalar_lea.vmem [#allocation9], %s1336
        %s1338 = sand.u32 %s36, 1
        %s1339 = scalar_lea.sflag [#allocation10], %s1338
        %s1340 = sand.u32 %s242, 1
        %s1341 = smul.addr %s1340, 32
        %s1342 = scalar_lea.vmem [#allocation11], %s1341
        %s1343 = sand.u32 %s268, 1
        %s1344 = scalar_lea.sflag [#allocation13], %s1343
        %s1345 = sand.u32 %s268, 1
        %s1346 = smul.addr %s1345, 4
        %s1347 = scalar_lea.vmem [#allocation12], %s1346
        // Predicated region
        $region57: #{tpu_custom_call.1} parent=43 // pred_check
          %p1348 = pneg %p200
        $region58: #{tpu_custom_call.1} parent=43 // pred_check_branch
          %1350 = sbr.rel (%p1348) target = $region60
        $region59: #{tpu_custom_call.1} parent=43 // pred_region
          %s1352 = ssub.s32 512, 512
          %1353 = vsyncadd %s1329, %s1352
          %s1354 = smul.addr %s36, 8
          %s1355 = smul.addr %s1354, 64
          %s1356 = scalar_lea.hbm %s6, %s1355
          %s1357 = sshll.u32 %s1332, 4
          %s1358 = int_to_ptr.vmem [resolvable:$true] %s1357
          %1363 = dma.vmem_to_hbm [thread:$0]  %s1358, 512, %s1356, %s1329, 64, 64, 4
        $region60: #{tpu_custom_call.1} parent=43 // pred_fallthru
          _
        // Predicated region
        $region61: #{tpu_custom_call.1} parent=43 // pred_check
          %p1364 = pneg %p226
        $region62: #{tpu_custom_call.1} parent=43 // pred_check_branch
          %1366 = sbr.rel (%p1364) target = $region64
        $region63: #{tpu_custom_call.1} parent=43 // pred_region
          %s1368 = ssub.s32 512, 512
          %1369 = vsyncadd %s1334, %s1368
          %s1370 = smul.addr %s36, 4
          %s1371 = smul.addr %s1370, 128
          %s1372 = scalar_lea.hbm %s7, %s1371
          %s1373 = sshll.u32 %s1337, 4
          %s1374 = int_to_ptr.vmem [resolvable:$true] %s1373
          %1379 = dma.vmem_to_hbm [thread:$0]  %s1374, 512, %s1372, %s1334, 128, 128, 8
        $region64: #{tpu_custom_call.1} parent=43 // pred_fallthru
          _
        // Predicated region
        $region65: #{tpu_custom_call.1} parent=43 // pred_check
          %p1380 = pneg %p252
        $region66: #{tpu_custom_call.1} parent=43 // pred_check_branch
          %1382 = sbr.rel (%p1380) target = $region68
        $region67: #{tpu_custom_call.1} parent=43 // pred_region
          %s1384 = ssub.s32 512, 512
          %1385 = vsyncadd %s1339, %s1384
          %s1386 = smul.addr %s36, 4
          %s1387 = smul.addr %s1386, 128
          %s1388 = scalar_lea.hbm %s8, %s1387
          %s1389 = sshll.u32 %s1342, 4
          %s1390 = int_to_ptr.vmem [resolvable:$true] %s1389
          %1395 = dma.vmem_to_hbm [thread:$0]  %s1390, 512, %s1388, %s1339, 128, 128, 8
        $region68: #{tpu_custom_call.1} parent=43 // pred_fallthru
          _
        // Predicated region
        $region69: #{tpu_custom_call.1} parent=43 // pred_check
          %p1396 = pneg %p278
        $region70: #{tpu_custom_call.1} parent=43 // pred_check_branch
          %1398 = sbr.rel (%p1396) target = $region72
        $region71: #{tpu_custom_call.1} parent=43 // pred_region
          %s1400 = ssub.s32 64, 64
          %1401 = vsyncadd %s1344, %s1400
          %s1402 = smul.addr %s36, 64
          %s1403 = scalar_lea.hbm %s9, %s1402
          %s1405 = sshll.u32 %s1347, 4
          %s1406 = int_to_ptr.vmem [resolvable:$true] %s1405
          %1408 = dma.vmem_to_hbm [thread:$0]  %s1406, 64, %s1403, %s1344
        $region72: #{tpu_custom_call.1} parent=43 // pred_fallthru
          _
      $region44: #{tpu_custom_call.1} parent=5 // pred_fallthru
        _
      %p1409 = scmp.le.s32.totalorder 2, %s31
      // Predicated region
      $region73: #{tpu_custom_call.1} parent=5 // pred_check
        %p1410 = pneg %p1409
      $region74: #{tpu_custom_call.1} parent=5 // pred_check_branch
        %1412 = sbr.rel (%p1410) target = $region76
      $region75: #{tpu_custom_call.1} parent=5 // pred_region
        %s1413 = ssub.s32 %s31, 2
        // Predicated region
        $region77: #{tpu_custom_call.1} parent=75 // pred_check
          %p1414 = pneg %p206
        $region78: #{tpu_custom_call.1} parent=75 // pred_check_branch
          %1416 = sbr.rel (%p1414) target = $region80
        $region79: #{tpu_custom_call.1} parent=75 // pred_region
          %s1417 = sand.u32 %s191, 1
          %s1418 = scalar_lea.sflag [#allocation4], %s1417
          %s1419 = sand.u32 %s191, 1
          %s1420 = smul.addr %s1419, 32
          %s1421 = scalar_lea.vmem [#allocation8], %s1420
          %1422 = dma.done %s1418, 512
        $region80: #{tpu_custom_call.1} parent=75 // pred_fallthru
          _
        // Predicated region
        $region81: #{tpu_custom_call.1} parent=75 // pred_check
          %p1423 = pneg %p232
        $region82: #{tpu_custom_call.1} parent=75 // pred_check_branch
          %1425 = sbr.rel (%p1423) target = $region84
        $region83: #{tpu_custom_call.1} parent=75 // pred_region
          %s1426 = sand.u32 %s37, 1
          %s1427 = scalar_lea.sflag [#allocation10], %s1426
          %s1428 = sand.u32 %s217, 1
          %s1429 = smul.addr %s1428, 32
          %s1430 = scalar_lea.vmem [#allocation9], %s1429
          %1431 = dma.done %s1427, 512
        $region84: #{tpu_custom_call.1} parent=75 // pred_fallthru
          _
        // Predicated region
        $region85: #{tpu_custom_call.1} parent=75 // pred_check
          %p1432 = pneg %p258
        $region86: #{tpu_custom_call.1} parent=75 // pred_check_branch
          %1434 = sbr.rel (%p1432) target = $region88
        $region87: #{tpu_custom_call.1} parent=75 // pred_region
          %s1435 = sand.u32 %s37, 1
          %s1436 = scalar_lea.sflag [#allocation10], %s1435
          %s1437 = sand.u32 %s243, 1
          %s1438 = smul.addr %s1437, 32
          %s1439 = scalar_lea.vmem [#allocation11], %s1438
          %1440 = dma.done %s1436, 512
        $region88: #{tpu_custom_call.1} parent=75 // pred_fallthru
          _
        // Predicated region
        $region89: #{tpu_custom_call.1} parent=75 // pred_check
          %p1441 = pneg %p284
        $region90: #{tpu_custom_call.1} parent=75 // pred_check_branch
          %1443 = sbr.rel (%p1441) target = $region92
        $region91: #{tpu_custom_call.1} parent=75 // pred_region
          %s1444 = sand.u32 %s269, 1
          %s1445 = scalar_lea.sflag [#allocation13], %s1444
          %s1446 = sand.u32 %s269, 1
          %s1447 = smul.addr %s1446, 4
          %s1448 = scalar_lea.vmem [#allocation12], %s1447
          %1449 = dma.done %s1445, 64
        $region92: #{tpu_custom_call.1} parent=75 // pred_fallthru
          _
      $region76: #{tpu_custom_call.1} parent=5 // pred_fallthru
        _
    $region6: #{tpu_custom_call.1} parent=1 // loop_footer
      %s35 = sadd.s32 1, %s31
    $region7: #{tpu_custom_call.1} parent=1 // loop_footer_branch
      %30 = sbr.rel target = $region3
    $region8: #{tpu_custom_call.1} parent=1 // loop_exit
      _
    %1450 = vsyncpa [#allocation3], 1
    %s1451 = scalar_lea.sflag [#allocation3], 1
    %1452 = vsyncpa %s1451, 1
    %1453 = vsyncpa [#allocation6], 1
    %s1454 = scalar_lea.sflag [#allocation6], 1
    %1455 = vsyncpa %s1454, 1
    %1456 = vsyncpa [#allocation4], 1
    %s1457 = scalar_lea.sflag [#allocation4], 1
    %1458 = vsyncpa %s1457, 1
    %1459 = vsyncpa [#allocation10], 1
    %s1460 = scalar_lea.sflag [#allocation10], 1
    %1461 = vsyncpa %s1460, 1
    %1462 = vsyncpa [#allocation13], 1
    %s1463 = scalar_lea.sflag [#allocation13], 1
    %1464 = vsyncpa %s1463, 1

</llo_original>
